<compile_context>
chip_gen: v7x
topology: tpu7x:2x2x1
jax: 0.10.0
libtpu: 0.0.40
codegen_flags: <defaults>
</compile_context>

<pallas_src>
import functools

import jax
import jax.numpy as jnp
from jax.experimental import pallas as pl
from jax.experimental.pallas import tpu as pltpu


def _round_up(x, m):
    return ((x + m - 1) // m) * m


def _largest_divisor(n, candidates):
    for c in candidates:
        if c <= n and n % c == 0:
            return c
    return None


def _device_kind():
    try:
        return jax.devices()[0].device_kind.lower()
    except Exception:  # pragma: no cover
        return ""


def _additive_attention_kernel(q_ref, kpT_ref, v_ref, vl_ref, wq_ref, wv_ref,
                               out_ref, qp_s, m_s, l_s, acc_s, *, compute_dtype):
    bi = pl.program_id(0)
    ki = pl.program_id(2)
    nk = pl.num_programs(2)

    bt, hdim, kt = kpT_ref.shape        # batch tile, hidden dim, K tile
    rows = q_ref.shape[0]               # rows == bt * qt (flattened batch*query)
    qt = rows // bt

    # ---- per (batch-tile, q-tile) init: project queries once, reset softmax state.
    @pl.when(ki == 0)
    def _init():
        qp_s[...] = jnp.dot(q_ref[...], wq_ref[...],
                            preferred_element_type=jnp.float32)      # (rows, H)
        m_s[...] = jnp.full(m_s.shape, -jnp.inf, jnp.float32)
        l_s[...] = jnp.zeros(l_s.shape, jnp.float32)
        acc_s[...] = jnp.zeros(acc_s.shape, jnp.float32)

    # Global key indices covered by this K tile (K on the lane axis).
    kidx = ki * kt + jax.lax.broadcasted_iota(jnp.int32, (qt, kt), 1)

    for b in range(bt):                 # small static unroll over local batches
        vl_b = vl_ref[bi * bt + b]

        def _tile_body(b=b, vl_b=vl_b):
            rs = slice(b * qt, (b + 1) * qt)     # 8-aligned scratch rows

            # scores[q, k] = sum_h w_v[h] * tanh(qp[q, h] + kp[h, k]); (qt, kt)
            # tile accumulated over H, never materializing (Q, K, H).
            # tanh runs in `compute_dtype` (bf16 on v6e/v7x); scores stay f32.
            # TODO(synk): for very large H, switch this static unroll to a
            # chunked lax.fori_loop to bound code size / compile time.
            scores = jnp.zeros((qt, kt), jnp.float32)
            for h in range(hdim):
                q_col = qp_s[rs, h:h + 1]            # (qt, 1) f32
                k_row = kpT_ref[b, h:h + 1, :]       # (1, kt) f32
                feat = (q_col + k_row).astype(compute_dtype)
                scores = scores + wv_ref[h] * jnp.tanh(feat).astype(jnp.float32)

            # masked_softmax fill, identical to the reference.
            scores = jnp.where(kidx < vl_b, scores, jnp.float32(-1e6))

            # Online (flash-style) softmax update across K tiles.
            m_prev = m_s[rs, :]
            m_new = jnp.maximum(m_prev, scores.max(axis=-1, keepdims=True))
            alpha = jnp.exp(m_prev - m_new)
            p = jnp.exp(scores - m_new)
            l_s[rs, :] = alpha * l_s[rs, :] + p.sum(axis=-1, keepdims=True)
            acc_s[rs, :] = alpha * acc_s[rs, :] + jnp.dot(
                p.astype(v_ref.dtype), v_ref[b],
                preferred_element_type=jnp.float32)
            m_s[rs, :] = m_new

        # Skip K tiles that lie entirely past valid_len (mask is a prefix; their
        # contribution is exactly zero).  valid_len == 0 must still process
        # every tile so the denominator matches the reference's uniform-weights
        # behaviour instead of dividing by zero.
        pl.when(jnp.logical_or(ki * kt < vl_b, vl_b == 0))(_tile_body)

    # TODO(synk): dropout on the attention weights is a no-op in eval mode.

    # ---- finalize: one lane-dense 2-D store of the whole (rows, Dv_pad) block.
    @pl.when(ki == nk - 1)
    def _finalize():
        inv_l = pl.reciprocal(l_s[...], approx=True)
        out_ref[...] = (acc_s[...] * inv_l).astype(out_ref.dtype)


def additive_attention(queries, keys, values, valid_lens, W_q, W_k, w_v, *,
                       block_b=None, block_q=None, block_k=None,
                       compute_dtype=None):
    """queries (B,Q,Dq), keys (B,K,Dk), values (B,K,Dv), valid_lens (B,) int,
    W_q (Dq,H), W_k (Dk,H), w_v (H,1). Returns (B,Q,Dv)."""
    B, Q, Dq = queries.shape
    _, K, Dk = keys.shape
    _, _, Dv = values.shape
    H = W_q.shape[1]

    kind = _device_kind()
    is_v7 = "v7" in kind
    if compute_dtype is None:
        # bf16 EUP / MXU exists on v6e & v7x; keep f32 on v5e and older.
        compute_dtype = jnp.bfloat16 if ("v6" in kind or "v7" in kind) else jnp.float32
    physical_vmem = (64 if is_v7 else 128) * 1024 * 1024
    vmem_budget = int(physical_vmem * 0.6)

    if valid_lens is None:
        valid_lens = jnp.full((B,), K, dtype=jnp.int32)
    assert valid_lens.ndim == 1
    # TODO(synk): per-query (B, Q)-shaped valid_lens is not supported here.

    # Pad Q to a multiple of 8 so per-batch scratch slices are sublane-aligned.
    Qp = _round_up(Q, 8)
    if Qp != Q:
        queries = jnp.pad(queries, ((0, 0), (0, Qp - Q), (0, 0)))

    # Lane-dense values / output: pad Dv up to a multiple of 128; stream values
    # in the compute dtype (bf16 on v6e/v7x), accumulate in f32.
    Dvp = _round_up(Dv, 128)
    values_p = values if Dvp == Dv else jnp.pad(values, ((0, 0), (0, 0), (0, Dvp - Dv)))
    values_p = values_p.astype(compute_dtype)

    # Hoisted key projection: one large MXU-friendly matmul in the wrapper,
    # passed pre-transposed as (B, H, K) so K sits on the lane axis in-kernel.
    kp = jnp.matmul(keys.astype(jnp.float32), W_k.astype(jnp.float32))   # (B,K,H)
    kp_T = jnp.swapaxes(kp, 1, 2)                                        # (B,H,K)

    q2d = queries.reshape(B * Qp, Dq)
    wv_flat = w_v.reshape(H).astype(jnp.float32)     # SMEM vector
    vlens = valid_lens.astype(jnp.int32)             # SMEM vector

    # ---- tile heuristics --------------------------------------------------
    if block_q is None:
        if B > 1 and Qp <= 512:
            block_q = Qp
        else:
            cap_q = max(Qp // 2, 8) if B == 1 else 512   # >=2 parallel q-blocks
            cands = [c for c in (512, 256, 128, 64, 32, 16, 8) if c <= cap_q]
            block_q = _largest_divisor(Qp, cands) or Qp
    assert block_q % 8 == 0 or block_q == Qp

    if block_b is None:
        if block_q != Qp or B == 1:
            block_b = 1
        else:
            cap = max(1, min(B // 2,                    # >=2 parallel blocks (v7x: 2 TCs)
                             8,                         # bound static b-unroll
                             max(1, 512 // max(Qp, 1)),  # bound rows per block
                             max(1, 512 // max(H, 1))))  # bound b*H unrolled code
            block_b = 1
            for c in range(cap, 0, -1):
                if B % c == 0:
                    block_b = c
                    break
    rows = block_b * block_q

    esz = jnp.dtype(compute_dtype).itemsize
    out_esz = jnp.dtype(queries.dtype).itemsize

    def _vmem_need(bk):
        n = 2 * rows * Dq * 4                 # queries block (double-buffered)
        n += 2 * block_b * H * bk * 4         # projected-keys block
        n += 2 * block_b * bk * Dvp * esz     # values block
        n += 2 * rows * Dvp * out_esz         # output block
        n += 2 * Dq * H * 4                   # W_q
        n += rows * (H + Dvp + 2) * 4         # scratch (qp, acc, m, l)
        return n

    if block_k is None:
        block_k = None
        for c in (2048, 1024, 512, 384, 256, 128):
            if c <= K and K % c == 0 and _vmem_need(c) <= vmem_budget:
                block_k = c
                break
        if block_k is None:
            # TODO(synk): pad K to a multiple of 128 for large, oddly-sized K.
            block_k = _largest_divisor(K, (128,)) or K

    assert B % block_b == 0 and Qp % block_q == 0 and K % block_k == 0
    assert block_q == Qp or block_b == 1
    assert rows % 8 == 0

    need = _vmem_need(block_k)
    vmem_limit = int(min(physical_vmem - (16 << 20),
                         max(32 << 20, need + (8 << 20))))

    nb, nq, nk = B // block_b, Qp // block_q, K // block_k
    grid = (nb, nq, nk)

    in_specs = [
        pl.BlockSpec((rows, Dq), lambda bi, qi, ki: (bi * nq + qi, 0)),       # queries
        pl.BlockSpec((block_b, H, block_k), lambda bi, qi, ki: (bi, 0, ki)),  # proj keys^T
        pl.BlockSpec((block_b, block_k, Dvp), lambda bi, qi, ki: (bi, ki, 0)),  # values
        pl.BlockSpec(memory_space=pltpu.MemorySpace.SMEM),                    # valid_lens
        pl.BlockSpec((Dq, H), lambda bi, qi, ki: (0, 0)),                     # W_q
        pl.BlockSpec(memory_space=pltpu.MemorySpace.SMEM),                    # w_v
    ]
    out_specs = pl.BlockSpec((rows, Dvp), lambda bi, qi, ki: (bi * nq + qi, 0))

    scratch_shapes = [
        pltpu.VMEM((rows, H), jnp.float32),      # projected queries
        pltpu.VMEM((rows, 1), jnp.float32),      # running max
        pltpu.VMEM((rows, 1), jnp.float32),      # running denominator
        pltpu.VMEM((rows, Dvp), jnp.float32),    # running numerator
    ]

    cost = pl.CostEstimate(
        flops=int(2 * B * Qp * Dq * H + 4 * B * Qp * K * H
                  + 2 * B * Qp * K * Dvp + 6 * B * Qp * K),
        transcendentals=int(B * Qp * K * (H + 1)),
        bytes_accessed=int(4 * (B * Qp * Dq + B * H * K + B * Qp * Dvp
                                + Dq * H + H + B) + esz * B * K * Dvp),
    )

    kernel = functools.partial(_additive_attention_kernel,
                               compute_dtype=compute_dtype)

    out2d = pl.pallas_call(
        kernel,
        out_shape=jax.ShapeDtypeStruct((B * Qp, Dvp), queries.dtype),
        grid=grid,
        in_specs=in_specs,
        out_specs=out_specs,
        scratch_shapes=scratch_shapes,
        compiler_params=pltpu.CompilerParams(
            dimension_semantics=("parallel", "parallel", "arbitrary"),
            vmem_limit_bytes=vmem_limit),
        cost_estimate=cost,
    )(q2d, kp_T, values_p, vlens, W_q, wv_flat)

    return out2d.reshape(B, Qp, Dvp)[:, :Q, :Dv]


def _reference(queries, keys, values, valid_lens, W_q, W_k, w_v):
    q = queries @ W_q
    k = keys @ W_k
    feats = jnp.tanh(q[:, :, None, :] + k[:, None, :, :])
    scores = (feats @ w_v)[..., 0]                       # (B, Q, K)
    Kdim = scores.shape[-1]
    mask = jnp.arange(Kdim)[None, None, :] < valid_lens[:, None, None]
    scores = jnp.where(mask, scores, -1e6)
    weights = jax.nn.softmax(scores, axis=-1)
    return weights @ values


def _init_linear(k, fan_in, fan_out):
    bound = 1.0 / jnp.sqrt(jnp.float32(fan_in))
    return jax.random.uniform(k, (fan_in, fan_out), jnp.float32, -bound, bound)


if __name__ == "__main__":
    root = jax.random.PRNGKey(0)

    # ---- Case 1: small shapes consistent with the module's forward. ----
    B, Q, K, Dq, Dk, Dv, H = 2, 4, 10, 16, 8, 12, 32
    kq, kk, kv, kwq, kwk, kwv, k2 = jax.random.split(root, 7)

    queries = jax.random.normal(kq, (B, Q, Dq), dtype=jnp.float32)
    keys = jax.random.normal(kk, (B, K, Dk), dtype=jnp.float32)
    values = jax.random.normal(kv, (B, K, Dv), dtype=jnp.float32)
    valid_lens = jnp.array([3, 7], dtype=jnp.int32)
    W_q = _init_linear(kwq, Dq, H)
    W_k = _init_linear(kwk, Dk, H)
    w_v = _init_linear(kwv, H, 1)

    ref = _reference(queries, keys, values, valid_lens, W_q, W_k, w_v)

    # Exact (f32) path: strict check against the reference.
    f_exact = jax.jit(functools.partial(additive_attention,
                                        compute_dtype=jnp.float32))
    out_exact = jax.block_until_ready(
        f_exact(queries, keys, values, valid_lens, W_q, W_k, w_v))
    assert out_exact.shape == (B, Q, Dv)
    assert jnp.allclose(out_exact, ref, atol=2e-3, rtol=2e-3), \
        "f32 kernel mismatch vs JAX reference"

    # Default (auto compute dtype: bf16 tanh / bf16 PV on v6e & v7x) path.
    out_fast = jax.block_until_ready(
        jax.jit(additive_attention)(queries, keys, values, valid_lens, W_q, W_k, w_v))
    assert out_fast.shape == (B, Q, Dv)
    assert jnp.allclose(out_fast, ref, atol=5e-2, rtol=5e-2), \
        "fast-path kernel mismatch vs JAX reference"

    # ---- Case 2: ragged batch, multiple K tiles (exercises masked-tile
    # skipping, the valid_len == 0 degenerate path, and Dv/Q padding). ----
    B2, Q2, K2, Dq2, Dk2, Dv2, H2 = 4, 8, 256, 16, 8, 64, 64
    kq2, kk2, kv2, kwq2, kwk2, kwv2 = jax.random.split(k2, 6)
    queries2 = jax.random.normal(kq2, (B2, Q2, Dq2), dtype=jnp.float32)
    keys2 = jax.random.normal(kk2, (B2, K2, Dk2), dtype=jnp.float32)
    values2 = jax.random.normal(kv2, (B2, K2, Dv2), dtype=jnp.float32)
    valid_lens2 = jnp.array([0, 5, 130, 256], dtype=jnp.int32)
    W_q2 = _init_linear(kwq2, Dq2, H2)
    W_k2 = _init_linear(kwk2, Dk2, H2)
    w_v2 = _init_linear(kwv2, H2, 1)

    ref2 = _reference(queries2, keys2, values2, valid_lens2, W_q2, W_k2, w_v2)
    f2 = jax.jit(functools.partial(additive_attention,
                                   compute_dtype=jnp.float32, block_k=128))
    out2 = jax.block_until_ready(
        f2(queries2, keys2, values2, valid_lens2, W_q2, W_k2, w_v2))
    assert out2.shape == (B2, Q2, Dv2)
    assert jnp.allclose(out2, ref2, atol=5e-3, rtol=5e-3), \
        "ragged-batch kernel mismatch vs JAX reference"

    print("KERNEL_OK")
</pallas_src>

<mosaic_0001>
module attributes {stable_mosaic.version = 11 : i64} {
  func.func @_additive_attention_kernel(%arg0: i32, %arg1: i32, %arg2: i32, %arg3: memref<8x16xf32, #tpu.memory_space<vmem>>, %arg4: memref<1x32x10xf32, #tpu.memory_space<vmem>>, %arg5: memref<1x10x128xf32, #tpu.memory_space<vmem>>, %arg6: memref<2xi32, #tpu.memory_space<smem>>, %arg7: memref<16x32xf32, #tpu.memory_space<vmem>>, %arg8: memref<32xf32, #tpu.memory_space<smem>>, %arg9: memref<8x128xf32, #tpu.memory_space<vmem>>, %arg10: memref<8x32xf32, #tpu.memory_space<vmem>>, %arg11: memref<8x1xf32, #tpu.memory_space<vmem>>, %arg12: memref<8x1xf32, #tpu.memory_space<vmem>>, %arg13: memref<8x128xf32, #tpu.memory_space<vmem>>) attributes {dimension_semantics = [#tpu.dimension_semantics<parallel>, #tpu.dimension_semantics<parallel>, #tpu.dimension_semantics<arbitrary>], iteration_bounds = array<i64: 2, 1, 1>, scalar_prefetch = 0 : i64, scratch_operands = 4 : i64, tpu.core_type = #tpu.core_type<tc>, window_params = [{transform_indices = @transform_0, window_bounds = array<i64: 8, 16>}, {transform_indices = @transform_1, window_bounds = array<i64: 1, 32, 10>}, {transform_indices = @transform_2, window_bounds = array<i64: 1, 10, 128>}, {transform_indices = @transform_3, window_bounds = array<i64: 2>}, {pipeline_mode = #tpu.pipeline_mode<synchronous>, transform_indices = @transform_4, window_bounds = array<i64: 16, 32>}, {transform_indices = @transform_5, window_bounds = array<i64: 32>}, {transform_indices = @transform_6, window_bounds = array<i64: 8, 128>}]} {
    %c0_i32 = arith.constant 0 : i32
    %0 = arith.cmpi eq, %arg2, %c0_i32 : i32
    %1 = arith.extui %0 : i1 to i32
    %c0_i32_0 = arith.constant 0 : i32
    %2 = arith.cmpi ne, %1, %c0_i32_0 : i32
    scf.if %2 {
      %c0 = arith.constant 0 : index
      %c0_7 = arith.constant 0 : index
      %20 = vector.load %arg3[%c0, %c0_7] : memref<8x16xf32, #tpu.memory_space<vmem>>, vector<8x16xf32>
      %c0_8 = arith.constant 0 : index
      %c0_9 = arith.constant 0 : index
      %21 = vector.load %arg7[%c0_8, %c0_9] : memref<16x32xf32, #tpu.memory_space<vmem>>, vector<16x32xf32>
      %cst = arith.constant dense<0.000000e+00> : vector<8x32xf32>
      %22 = tpu.matmul %20, %21, %cst {dimension_numbers = #tpu.dot_dimension_numbers<[1], [0], [0], [1], [0, 0, 1, 1], [], []>} : vector<8x16xf32>, vector<16x32xf32>, vector<8x32xf32> -> vector<8x32xf32>
      %c0_10 = arith.constant 0 : index
      %c0_11 = arith.constant 0 : index
      %23 = vector.load %arg10[%c0_10, %c0_11] : memref<8x32xf32, #tpu.memory_space<vmem>>, vector<8x32xf32>
      tpu.vector_store %arg10[%c0_10, %c0_11], %22 {strides = array<i32>} : memref<8x32xf32, #tpu.memory_space<vmem>>, vector<8x32xf32>,
      %cst_12 = arith.constant 0xFF800000 : f32
      %24 = vector.broadcast %cst_12 : f32 to vector<8x1xf32>
      %c0_13 = arith.constant 0 : index
      %c0_14 = arith.constant 0 : index
      %25 = vector.load %arg11[%c0_13, %c0_14] : memref<8x1xf32, #tpu.memory_space<vmem>>, vector<8x1xf32>
      tpu.vector_store %arg11[%c0_13, %c0_14], %24 {strides = array<i32>} : memref<8x1xf32, #tpu.memory_space<vmem>>, vector<8x1xf32>,
      %cst_15 = arith.constant 0.000000e+00 : f32
      %26 = vector.broadcast %cst_15 : f32 to vector<8x1xf32>
      %c0_16 = arith.constant 0 : index
      %c0_17 = arith.constant 0 : index
      %27 = vector.load %arg12[%c0_16, %c0_17] : memref<8x1xf32, #tpu.memory_space<vmem>>, vector<8x1xf32>
      tpu.vector_store %arg12[%c0_16, %c0_17], %26 {strides = array<i32>} : memref<8x1xf32, #tpu.memory_space<vmem>>, vector<8x1xf32>,
      %cst_18 = arith.constant 0.000000e+00 : f32
      %28 = vector.broadcast %cst_18 : f32 to vector<8x128xf32>
      %c0_19 = arith.constant 0 : index
      %c0_20 = arith.constant 0 : index
      %29 = vector.load %arg13[%c0_19, %c0_20] : memref<8x128xf32, #tpu.memory_space<vmem>>, vector<8x128xf32>
      tpu.vector_store %arg13[%c0_19, %c0_20], %28 {strides = array<i32>} : memref<8x128xf32, #tpu.memory_space<vmem>>, vector<8x128xf32>,
    } else {
    }
    %c10_i32 = arith.constant 10 : i32
    %3 = arith.muli %arg2, %c10_i32 : i32
    %4 = tpu.iota {dimensions = array<i32: 1>} : vector<8x10xi32>
    %5 = vector.broadcast %3 : i32 to vector<8x10xi32>
    %6 = arith.addi %5, %4 : vector<8x10xi32>
    %c1_i32 = arith.constant 1 : i32
    %7 = arith.muli %arg0, %c1_i32 : i32
    %c0_i32_1 = arith.constant 0 : i32
    %8 = arith.addi %7, %c0_i32_1 : i32
    %9 = arith.index_cast %8 : i32 to index
    %10 = memref.load %arg6[%9] : memref<2xi32, #tpu.memory_space<smem>>
    %c10_i32_2 = arith.constant 10 : i32
    %11 = arith.muli %arg2, %c10_i32_2 : i32
    %12 = arith.cmpi slt, %11, %10 : i32
    %c0_i32_3 = arith.constant 0 : i32
    %13 = arith.cmpi eq, %10, %c0_i32_3 : i32
    %14 = arith.ori %12, %13 : i1
    %15 = arith.extui %14 : i1 to i32
    %c0_i32_4 = arith.constant 0 : i32
    %16 = arith.cmpi ne, %15, %c0_i32_4 : i32
    scf.if %16 {
      %cst = arith.constant 0.000000e+00 : f32
      %20 = vector.broadcast %cst : f32 to vector<8x10xf32>
      %c0 = arith.constant 0 : index
      %c0_7 = arith.constant 0 : index
      %21 = vector.load %arg10[%c0, %c0_7] : memref<8x32xf32, #tpu.memory_space<vmem>>, vector<8x1xf32>
      %c0_8 = arith.constant 0 : index
      %c0_9 = arith.constant 0 : index
      %c0_10 = arith.constant 0 : index
      %22 = vector.load %arg4[%c0_8, %c0_9, %c0_10] : memref<1x32x10xf32, #tpu.memory_space<vmem>>, vector<1x1x10xf32>
      %23 = vector.shape_cast %22 : vector<1x1x10xf32> to vector<1x10xf32>
      %24 = vector.broadcast %21 : vector<8x1xf32> to vector<8x10xf32>
      %25 = vector.broadcast %23 : vector<1x10xf32> to vector<8x10xf32>
      %26 = arith.addf %24, %25 : vector<8x10xf32>
      %c0_11 = arith.constant 0 : index
      %27 = memref.load %arg8[%c0_11] : memref<32xf32, #tpu.memory_space<smem>>
      %28 = math.tanh %26 : vector<8x10xf32>
      %29 = vector.broadcast %27 : f32 to vector<8x10xf32>
      %30 = arith.mulf %29, %28 : vector<8x10xf32>
      %31 = arith.addf %20, %30 : vector<8x10xf32>
      %c0_12 = arith.constant 0 : index
      %c1 = arith.constant 1 : index
      %32 = vector.load %arg10[%c0_12, %c1] : memref<8x32xf32, #tpu.memory_space<vmem>>, vector<8x1xf32>
      %c0_13 = arith.constant 0 : index
      %c1_14 = arith.constant 1 : index
      %c0_15 = arith.constant 0 : index
      %33 = vector.load %arg4[%c0_13, %c1_14, %c0_15] : memref<1x32x10xf32, #tpu.memory_space<vmem>>, vector<1x1x10xf32>
      %34 = vector.shape_cast %33 : vector<1x1x10xf32> to vector<1x10xf32>
      %35 = vector.broadcast %32 : vector<8x1xf32> to vector<8x10xf32>
      %36 = vector.broadcast %34 : vector<1x10xf32> to vector<8x10xf32>
      %37 = arith.addf %35, %36 : vector<8x10xf32>
      %c1_16 = arith.constant 1 : index
      %38 = memref.load %arg8[%c1_16] : memref<32xf32, #tpu.memory_space<smem>>
      %39 = math.tanh %37 : vector<8x10xf32>
      %40 = vector.broadcast %38 : f32 to vector<8x10xf32>
      %41 = arith.mulf %40, %39 : vector<8x10xf32>
      %42 = arith.addf %31, %41 : vector<8x10xf32>
      %c0_17 = arith.constant 0 : index
      %c2 = arith.constant 2 : index
      %43 = vector.load %arg10[%c0_17, %c2] : memref<8x32xf32, #tpu.memory_space<vmem>>, vector<8x1xf32>
      %c0_18 = arith.constant 0 : index
      %c2_19 = arith.constant 2 : index
      %c0_20 = arith.constant 0 : index
      %44 = vector.load %arg4[%c0_18, %c2_19, %c0_20] : memref<1x32x10xf32, #tpu.memory_space<vmem>>, vector<1x1x10xf32>
      %45 = vector.shape_cast %44 : vector<1x1x10xf32> to vector<1x10xf32>
      %46 = vector.broadcast %43 : vector<8x1xf32> to vector<8x10xf32>
      %47 = vector.broadcast %45 : vector<1x10xf32> to vector<8x10xf32>
      %48 = arith.addf %46, %47 : vector<8x10xf32>
      %c2_21 = arith.constant 2 : index
      %49 = memref.load %arg8[%c2_21] : memref<32xf32, #tpu.memory_space<smem>>
      %50 = math.tanh %48 : vector<8x10xf32>
      %51 = vector.broadcast %49 : f32 to vector<8x10xf32>
      %52 = arith.mulf %51, %50 : vector<8x10xf32>
      %53 = arith.addf %42, %52 : vector<8x10xf32>
      %c0_22 = arith.constant 0 : index
      %c3 = arith.constant 3 : index
      %54 = vector.load %arg10[%c0_22, %c3] : memref<8x32xf32, #tpu.memory_space<vmem>>, vector<8x1xf32>
      %c0_23 = arith.constant 0 : index
      %c3_24 = arith.constant 3 : index
      %c0_25 = arith.constant 0 : index
      %55 = vector.load %arg4[%c0_23, %c3_24, %c0_25] : memref<1x32x10xf32, #tpu.memory_space<vmem>>, vector<1x1x10xf32>
      %56 = vector.shape_cast %55 : vector<1x1x10xf32> to vector<1x10xf32>
      %57 = vector.broadcast %54 : vector<8x1xf32> to vector<8x10xf32>
      %58 = vector.broadcast %56 : vector<1x10xf32> to vector<8x10xf32>
      %59 = arith.addf %57, %58 : vector<8x10xf32>
      %c3_26 = arith.constant 3 : index
      %60 = memref.load %arg8[%c3_26] : memref<32xf32, #tpu.memory_space<smem>>
      %61 = math.tanh %59 : vector<8x10xf32>
      %62 = vector.broadcast %60 : f32 to vector<8x10xf32>
      %63 = arith.mulf %62, %61 : vector<8x10xf32>
      %64 = arith.addf %53, %63 : vector<8x10xf32>
      %c0_27 = arith.constant 0 : index
      %c4 = arith.constant 4 : index
      %65 = vector.load %arg10[%c0_27, %c4] : memref<8x32xf32, #tpu.memory_space<vmem>>, vector<8x1xf32>
      %c0_28 = arith.constant 0 : index
      %c4_29 = arith.constant 4 : index
      %c0_30 = arith.constant 0 : index
      %66 = vector.load %arg4[%c0_28, %c4_29, %c0_30] : memref<1x32x10xf32, #tpu.memory_space<vmem>>, vector<1x1x10xf32>
      %67 = vector.shape_cast %66 : vector<1x1x10xf32> to vector<1x10xf32>
      %68 = vector.broadcast %65 : vector<8x1xf32> to vector<8x10xf32>
      %69 = vector.broadcast %67 : vector<1x10xf32> to vector<8x10xf32>
      %70 = arith.addf %68, %69 : vector<8x10xf32>
      %c4_31 = arith.constant 4 : index
      %71 = memref.load %arg8[%c4_31] : memref<32xf32, #tpu.memory_space<smem>>
      %72 = math.tanh %70 : vector<8x10xf32>
      %73 = vector.broadcast %71 : f32 to vector<8x10xf32>
      %74 = arith.mulf %73, %72 : vector<8x10xf32>
      %75 = arith.addf %64, %74 : vector<8x10xf32>
      %c0_32 = arith.constant 0 : index
      %c5 = arith.constant 5 : index
      %76 = vector.load %arg10[%c0_32, %c5] : memref<8x32xf32, #tpu.memory_space<vmem>>, vector<8x1xf32>
      %c0_33 = arith.constant 0 : index
      %c5_34 = arith.constant 5 : index
      %c0_35 = arith.constant 0 : index
      %77 = vector.load %arg4[%c0_33, %c5_34, %c0_35] : memref<1x32x10xf32, #tpu.memory_space<vmem>>, vector<1x1x10xf32>
      %78 = vector.shape_cast %77 : vector<1x1x10xf32> to vector<1x10xf32>
      %79 = vector.broadcast %76 : vector<8x1xf32> to vector<8x10xf32>
      %80 = vector.broadcast %78 : vector<1x10xf32> to vector<8x10xf32>
      %81 = arith.addf %79, %80 : vector<8x10xf32>
      %c5_36 = arith.constant 5 : index
      %82 = memref.load %arg8[%c5_36] : memref<32xf32, #tpu.memory_space<smem>>
      %83 = math.tanh %81 : vector<8x10xf32>
      %84 = vector.broadcast %82 : f32 to vector<8x10xf32>
      %85 = arith.mulf %84, %83 : vector<8x10xf32>
      %86 = arith.addf %75, %85 : vector<8x10xf32>
      %c0_37 = arith.constant 0 : index
      %c6 = arith.constant 6 : index
      %87 = vector.load %arg10[%c0_37, %c6] : memref<8x32xf32, #tpu.memory_space<vmem>>, vector<8x1xf32>
      %c0_38 = arith.constant 0 : index
      %c6_39 = arith.constant 6 : index
      %c0_40 = arith.constant 0 : index
      %88 = vector.load %arg4[%c0_38, %c6_39, %c0_40] : memref<1x32x10xf32, #tpu.memory_space<vmem>>, vector<1x1x10xf32>
      %89 = vector.shape_cast %88 : vector<1x1x10xf32> to vector<1x10xf32>
      %90 = vector.broadcast %87 : vector<8x1xf32> to vector<8x10xf32>
      %91 = vector.broadcast %89 : vector<1x10xf32> to vector<8x10xf32>
      %92 = arith.addf %90, %91 : vector<8x10xf32>
      %c6_41 = arith.constant 6 : index
      %93 = memref.load %arg8[%c6_41] : memref<32xf32, #tpu.memory_space<smem>>
      %94 = math.tanh %92 : vector<8x10xf32>
      %95 = vector.broadcast %93 : f32 to vector<8x10xf32>
      %96 = arith.mulf %95, %94 : vector<8x10xf32>
      %97 = arith.addf %86, %96 : vector<8x10xf32>
      %c0_42 = arith.constant 0 : index
      %c7 = arith.constant 7 : index
      %98 = vector.load %arg10[%c0_42, %c7] : memref<8x32xf32, #tpu.memory_space<vmem>>, vector<8x1xf32>
      %c0_43 = arith.constant 0 : index
      %c7_44 = arith.constant 7 : index
      %c0_45 = arith.constant 0 : index
      %99 = vector.load %arg4[%c0_43, %c7_44, %c0_45] : memref<1x32x10xf32, #tpu.memory_space<vmem>>, vector<1x1x10xf32>
      %100 = vector.shape_cast %99 : vector<1x1x10xf32> to vector<1x10xf32>
      %101 = vector.broadcast %98 : vector<8x1xf32> to vector<8x10xf32>
      %102 = vector.broadcast %100 : vector<1x10xf32> to vector<8x10xf32>
      %103 = arith.addf %101, %102 : vector<8x10xf32>
      %c7_46 = arith.constant 7 : index
      %104 = memref.load %arg8[%c7_46] : memref<32xf32, #tpu.memory_space<smem>>
      %105 = math.tanh %103 : vector<8x10xf32>
      %106 = vector.broadcast %104 : f32 to vector<8x10xf32>
      %107 = arith.mulf %106, %105 : vector<8x10xf32>
      %108 = arith.addf %97, %107 : vector<8x10xf32>
      %c0_47 = arith.constant 0 : index
      %c8 = arith.constant 8 : index
      %109 = vector.load %arg10[%c0_47, %c8] : memref<8x32xf32, #tpu.memory_space<vmem>>, vector<8x1xf32>
      %c0_48 = arith.constant 0 : index
      %c8_49 = arith.constant 8 : index
      %c0_50 = arith.constant 0 : index
      %110 = vector.load %arg4[%c0_48, %c8_49, %c0_50] : memref<1x32x10xf32, #tpu.memory_space<vmem>>, vector<1x1x10xf32>
      %111 = vector.shape_cast %110 : vector<1x1x10xf32> to vector<1x10xf32>
      %112 = vector.broadcast %109 : vector<8x1xf32> to vector<8x10xf32>
      %113 = vector.broadcast %111 : vector<1x10xf32> to vector<8x10xf32>
      %114 = arith.addf %112, %113 : vector<8x10xf32>
      %c8_51 = arith.constant 8 : index
      %115 = memref.load %arg8[%c8_51] : memref<32xf32, #tpu.memory_space<smem>>
      %116 = math.tanh %114 : vector<8x10xf32>
      %117 = vector.broadcast %115 : f32 to vector<8x10xf32>
      %118 = arith.mulf %117, %116 : vector<8x10xf32>
      %119 = arith.addf %108, %118 : vector<8x10xf32>
      %c0_52 = arith.constant 0 : index
      %c9 = arith.constant 9 : index
      %120 = vector.load %arg10[%c0_52, %c9] : memref<8x32xf32, #tpu.memory_space<vmem>>, vector<8x1xf32>
      %c0_53 = arith.constant 0 : index
      %c9_54 = arith.constant 9 : index
      %c0_55 = arith.constant 0 : index
      %121 = vector.load %arg4[%c0_53, %c9_54, %c0_55] : memref<1x32x10xf32, #tpu.memory_space<vmem>>, vector<1x1x10xf32>
      %122 = vector.shape_cast %121 : vector<1x1x10xf32> to vector<1x10xf32>
      %123 = vector.broadcast %120 : vector<8x1xf32> to vector<8x10xf32>
      %124 = vector.broadcast %122 : vector<1x10xf32> to vector<8x10xf32>
      %125 = arith.addf %123, %124 : vector<8x10xf32>
      %c9_56 = arith.constant 9 : index
      %126 = memref.load %arg8[%c9_56] : memref<32xf32, #tpu.memory_space<smem>>
      %127 = math.tanh %125 : vector<8x10xf32>
      %128 = vector.broadcast %126 : f32 to vector<8x10xf32>
      %129 = arith.mulf %128, %127 : vector<8x10xf32>
      %130 = arith.addf %119, %129 : vector<8x10xf32>
      %c0_57 = arith.constant 0 : index
      %c10 = arith.constant 10 : index
      %131 = vector.load %arg10[%c0_57, %c10] : memref<8x32xf32, #tpu.memory_space<vmem>>, vector<8x1xf32>
      %c0_58 = arith.constant 0 : index
      %c10_59 = arith.constant 10 : index
      %c0_60 = arith.constant 0 : index
      %132 = vector.load %arg4[%c0_58, %c10_59, %c0_60] : memref<1x32x10xf32, #tpu.memory_space<vmem>>, vector<1x1x10xf32>
      %133 = vector.shape_cast %132 : vector<1x1x10xf32> to vector<1x10xf32>
      %134 = vector.broadcast %131 : vector<8x1xf32> to vector<8x10xf32>
      %135 = vector.broadcast %133 : vector<1x10xf32> to vector<8x10xf32>
      %136 = arith.addf %134, %135 : vector<8x10xf32>
      %c10_61 = arith.constant 10 : index
      %137 = memref.load %arg8[%c10_61] : memref<32xf32, #tpu.memory_space<smem>>
      %138 = math.tanh %136 : vector<8x10xf32>
      %139 = vector.broadcast %137 : f32 to vector<8x10xf32>
      %140 = arith.mulf %139, %138 : vector<8x10xf32>
      %141 = arith.addf %130, %140 : vector<8x10xf32>
      %c0_62 = arith.constant 0 : index
      %c11 = arith.constant 11 : index
      %142 = vector.load %arg10[%c0_62, %c11] : memref<8x32xf32, #tpu.memory_space<vmem>>, vector<8x1xf32>
      %c0_63 = arith.constant 0 : index
      %c11_64 = arith.constant 11 : index
      %c0_65 = arith.constant 0 : index
      %143 = vector.load %arg4[%c0_63, %c11_64, %c0_65] : memref<1x32x10xf32, #tpu.memory_space<vmem>>, vector<1x1x10xf32>
      %144 = vector.shape_cast %143 : vector<1x1x10xf32> to vector<1x10xf32>
      %145 = vector.broadcast %142 : vector<8x1xf32> to vector<8x10xf32>
      %146 = vector.broadcast %144 : vector<1x10xf32> to vector<8x10xf32>
      %147 = arith.addf %145, %146 : vector<8x10xf32>
      %c11_66 = arith.constant 11 : index
      %148 = memref.load %arg8[%c11_66] : memref<32xf32, #tpu.memory_space<smem>>
      %149 = math.tanh %147 : vector<8x10xf32>
      %150 = vector.broadcast %148 : f32 to vector<8x10xf32>
      %151 = arith.mulf %150, %149 : vector<8x10xf32>
      %152 = arith.addf %141, %151 : vector<8x10xf32>
      %c0_67 = arith.constant 0 : index
      %c12 = arith.constant 12 : index
      %153 = vector.load %arg10[%c0_67, %c12] : memref<8x32xf32, #tpu.memory_space<vmem>>, vector<8x1xf32>
      %c0_68 = arith.constant 0 : index
      %c12_69 = arith.constant 12 : index
      %c0_70 = arith.constant 0 : index
      %154 = vector.load %arg4[%c0_68, %c12_69, %c0_70] : memref<1x32x10xf32, #tpu.memory_space<vmem>>, vector<1x1x10xf32>
      %155 = vector.shape_cast %154 : vector<1x1x10xf32> to vector<1x10xf32>
      %156 = vector.broadcast %153 : vector<8x1xf32> to vector<8x10xf32>
      %157 = vector.broadcast %155 : vector<1x10xf32> to vector<8x10xf32>
      %158 = arith.addf %156, %157 : vector<8x10xf32>
      %c12_71 = arith.constant 12 : index
      %159 = memref.load %arg8[%c12_71] : memref<32xf32, #tpu.memory_space<smem>>
      %160 = math.tanh %158 : vector<8x10xf32>
      %161 = vector.broadcast %159 : f32 to vector<8x10xf32>
      %162 = arith.mulf %161, %160 : vector<8x10xf32>
      %163 = arith.addf %152, %162 : vector<8x10xf32>
      %c0_72 = arith.constant 0 : index
      %c13 = arith.constant 13 : index
      %164 = vector.load %arg10[%c0_72, %c13] : memref<8x32xf32, #tpu.memory_space<vmem>>, vector<8x1xf32>
      %c0_73 = arith.constant 0 : index
      %c13_74 = arith.constant 13 : index
      %c0_75 = arith.constant 0 : index
      %165 = vector.load %arg4[%c0_73, %c13_74, %c0_75] : memref<1x32x10xf32, #tpu.memory_space<vmem>>, vector<1x1x10xf32>
      %166 = vector.shape_cast %165 : vector<1x1x10xf32> to vector<1x10xf32>
      %167 = vector.broadcast %164 : vector<8x1xf32> to vector<8x10xf32>
      %168 = vector.broadcast %166 : vector<1x10xf32> to vector<8x10xf32>
      %169 = arith.addf %167, %168 : vector<8x10xf32>
      %c13_76 = arith.constant 13 : index
      %170 = memref.load %arg8[%c13_76] : memref<32xf32, #tpu.memory_space<smem>>
      %171 = math.tanh %169 : vector<8x10xf32>
      %172 = vector.broadcast %170 : f32 to vector<8x10xf32>
      %173 = arith.mulf %172, %171 : vector<8x10xf32>
      %174 = arith.addf %163, %173 : vector<8x10xf32>
      %c0_77 = arith.constant 0 : index
      %c14 = arith.constant 14 : index
      %175 = vector.load %arg10[%c0_77, %c14] : memref<8x32xf32, #tpu.memory_space<vmem>>, vector<8x1xf32>
      %c0_78 = arith.constant 0 : index
      %c14_79 = arith.constant 14 : index
      %c0_80 = arith.constant 0 : index
      %176 = vector.load %arg4[%c0_78, %c14_79, %c0_80] : memref<1x32x10xf32, #tpu.memory_space<vmem>>, vector<1x1x10xf32>
      %177 = vector.shape_cast %176 : vector<1x1x10xf32> to vector<1x10xf32>
      %178 = vector.broadcast %175 : vector<8x1xf32> to vector<8x10xf32>
      %179 = vector.broadcast %177 : vector<1x10xf32> to vector<8x10xf32>
      %180 = arith.addf %178, %179 : vector<8x10xf32>
      %c14_81 = arith.constant 14 : index
      %181 = memref.load %arg8[%c14_81] : memref<32xf32, #tpu.memory_space<smem>>
      %182 = math.tanh %180 : vector<8x10xf32>
      %183 = vector.broadcast %181 : f32 to vector<8x10xf32>
      %184 = arith.mulf %183, %182 : vector<8x10xf32>
      %185 = arith.addf %174, %184 : vector<8x10xf32>
      %c0_82 = arith.constant 0 : index
      %c15 = arith.constant 15 : index
      %186 = vector.load %arg10[%c0_82, %c15] : memref<8x32xf32, #tpu.memory_space<vmem>>, vector<8x1xf32>
      %c0_83 = arith.constant 0 : index
      %c15_84 = arith.constant 15 : index
      %c0_85 = arith.constant 0 : index
      %187 = vector.load %arg4[%c0_83, %c15_84, %c0_85] : memref<1x32x10xf32, #tpu.memory_space<vmem>>, vector<1x1x10xf32>
      %188 = vector.shape_cast %187 : vector<1x1x10xf32> to vector<1x10xf32>
      %189 = vector.broadcast %186 : vector<8x1xf32> to vector<8x10xf32>
      %190 = vector.broadcast %188 : vector<1x10xf32> to vector<8x10xf32>
      %191 = arith.addf %189, %190 : vector<8x10xf32>
      %c15_86 = arith.constant 15 : index
      %192 = memref.load %arg8[%c15_86] : memref<32xf32, #tpu.memory_space<smem>>
      %193 = math.tanh %191 : vector<8x10xf32>
      %194 = vector.broadcast %192 : f32 to vector<8x10xf32>
      %195 = arith.mulf %194, %193 : vector<8x10xf32>
      %196 = arith.addf %185, %195 : vector<8x10xf32>
      %c0_87 = arith.constant 0 : index
      %c16 = arith.constant 16 : index
      %197 = vector.load %arg10[%c0_87, %c16] : memref<8x32xf32, #tpu.memory_space<vmem>>, vector<8x1xf32>
      %c0_88 = arith.constant 0 : index
      %c16_89 = arith.constant 16 : index
      %c0_90 = arith.constant 0 : index
      %198 = vector.load %arg4[%c0_88, %c16_89, %c0_90] : memref<1x32x10xf32, #tpu.memory_space<vmem>>, vector<1x1x10xf32>
      %199 = vector.shape_cast %198 : vector<1x1x10xf32> to vector<1x10xf32>
      %200 = vector.broadcast %197 : vector<8x1xf32> to vector<8x10xf32>
      %201 = vector.broadcast %199 : vector<1x10xf32> to vector<8x10xf32>
      %202 = arith.addf %200, %201 : vector<8x10xf32>
      %c16_91 = arith.constant 16 : index
      %203 = memref.load %arg8[%c16_91] : memref<32xf32, #tpu.memory_space<smem>>
      %204 = math.tanh %202 : vector<8x10xf32>
      %205 = vector.broadcast %203 : f32 to vector<8x10xf32>
      %206 = arith.mulf %205, %204 : vector<8x10xf32>
      %207 = arith.addf %196, %206 : vector<8x10xf32>
      %c0_92 = arith.constant 0 : index
      %c17 = arith.constant 17 : index
      %208 = vector.load %arg10[%c0_92, %c17] : memref<8x32xf32, #tpu.memory_space<vmem>>, vector<8x1xf32>
      %c0_93 = arith.constant 0 : index
      %c17_94 = arith.constant 17 : index
      %c0_95 = arith.constant 0 : index
      %209 = vector.load %arg4[%c0_93, %c17_94, %c0_95] : memref<1x32x10xf32, #tpu.memory_space<vmem>>, vector<1x1x10xf32>
      %210 = vector.shape_cast %209 : vector<1x1x10xf32> to vector<1x10xf32>
      %211 = vector.broadcast %208 : vector<8x1xf32> to vector<8x10xf32>
      %212 = vector.broadcast %210 : vector<1x10xf32> to vector<8x10xf32>
      %213 = arith.addf %211, %212 : vector<8x10xf32>
      %c17_96 = arith.constant 17 : index
      %214 = memref.load %arg8[%c17_96] : memref<32xf32, #tpu.memory_space<smem>>
      %215 = math.tanh %213 : vector<8x10xf32>
      %216 = vector.broadcast %214 : f32 to vector<8x10xf32>
      %217 = arith.mulf %216, %215 : vector<8x10xf32>
      %218 = arith.addf %207, %217 : vector<8x10xf32>
      %c0_97 = arith.constant 0 : index
      %c18 = arith.constant 18 : index
      %219 = vector.load %arg10[%c0_97, %c18] : memref<8x32xf32, #tpu.memory_space<vmem>>, vector<8x1xf32>
      %c0_98 = arith.constant 0 : index
      %c18_99 = arith.constant 18 : index
      %c0_100 = arith.constant 0 : index
      %220 = vector.load %arg4[%c0_98, %c18_99, %c0_100] : memref<1x32x10xf32, #tpu.memory_space<vmem>>, vector<1x1x10xf32>
      %221 = vector.shape_cast %220 : vector<1x1x10xf32> to vector<1x10xf32>
      %222 = vector.broadcast %219 : vector<8x1xf32> to vector<8x10xf32>
      %223 = vector.broadcast %221 : vector<1x10xf32> to vector<8x10xf32>
      %224 = arith.addf %222, %223 : vector<8x10xf32>
      %c18_101 = arith.constant 18 : index
      %225 = memref.load %arg8[%c18_101] : memref<32xf32, #tpu.memory_space<smem>>
      %226 = math.tanh %224 : vector<8x10xf32>
      %227 = vector.broadcast %225 : f32 to vector<8x10xf32>
      %228 = arith.mulf %227, %226 : vector<8x10xf32>
      %229 = arith.addf %218, %228 : vector<8x10xf32>
      %c0_102 = arith.constant 0 : index
      %c19 = arith.constant 19 : index
      %230 = vector.load %arg10[%c0_102, %c19] : memref<8x32xf32, #tpu.memory_space<vmem>>, vector<8x1xf32>
      %c0_103 = arith.constant 0 : index
      %c19_104 = arith.constant 19 : index
      %c0_105 = arith.constant 0 : index
      %231 = vector.load %arg4[%c0_103, %c19_104, %c0_105] : memref<1x32x10xf32, #tpu.memory_space<vmem>>, vector<1x1x10xf32>
      %232 = vector.shape_cast %231 : vector<1x1x10xf32> to vector<1x10xf32>
      %233 = vector.broadcast %230 : vector<8x1xf32> to vector<8x10xf32>
      %234 = vector.broadcast %232 : vector<1x10xf32> to vector<8x10xf32>
      %235 = arith.addf %233, %234 : vector<8x10xf32>
      %c19_106 = arith.constant 19 : index
      %236 = memref.load %arg8[%c19_106] : memref<32xf32, #tpu.memory_space<smem>>
      %237 = math.tanh %235 : vector<8x10xf32>
      %238 = vector.broadcast %236 : f32 to vector<8x10xf32>
      %239 = arith.mulf %238, %237 : vector<8x10xf32>
      %240 = arith.addf %229, %239 : vector<8x10xf32>
      %c0_107 = arith.constant 0 : index
      %c20 = arith.constant 20 : index
      %241 = vector.load %arg10[%c0_107, %c20] : memref<8x32xf32, #tpu.memory_space<vmem>>, vector<8x1xf32>
      %c0_108 = arith.constant 0 : index
      %c20_109 = arith.constant 20 : index
      %c0_110 = arith.constant 0 : index
      %242 = vector.load %arg4[%c0_108, %c20_109, %c0_110] : memref<1x32x10xf32, #tpu.memory_space<vmem>>, vector<1x1x10xf32>
      %243 = vector.shape_cast %242 : vector<1x1x10xf32> to vector<1x10xf32>
      %244 = vector.broadcast %241 : vector<8x1xf32> to vector<8x10xf32>
      %245 = vector.broadcast %243 : vector<1x10xf32> to vector<8x10xf32>
      %246 = arith.addf %244, %245 : vector<8x10xf32>
      %c20_111 = arith.constant 20 : index
      %247 = memref.load %arg8[%c20_111] : memref<32xf32, #tpu.memory_space<smem>>
      %248 = math.tanh %246 : vector<8x10xf32>
      %249 = vector.broadcast %247 : f32 to vector<8x10xf32>
      %250 = arith.mulf %249, %248 : vector<8x10xf32>
      %251 = arith.addf %240, %250 : vector<8x10xf32>
      %c0_112 = arith.constant 0 : index
      %c21 = arith.constant 21 : index
      %252 = vector.load %arg10[%c0_112, %c21] : memref<8x32xf32, #tpu.memory_space<vmem>>, vector<8x1xf32>
      %c0_113 = arith.constant 0 : index
      %c21_114 = arith.constant 21 : index
      %c0_115 = arith.constant 0 : index
      %253 = vector.load %arg4[%c0_113, %c21_114, %c0_115] : memref<1x32x10xf32, #tpu.memory_space<vmem>>, vector<1x1x10xf32>
      %254 = vector.shape_cast %253 : vector<1x1x10xf32> to vector<1x10xf32>
      %255 = vector.broadcast %252 : vector<8x1xf32> to vector<8x10xf32>
      %256 = vector.broadcast %254 : vector<1x10xf32> to vector<8x10xf32>
      %257 = arith.addf %255, %256 : vector<8x10xf32>
      %c21_116 = arith.constant 21 : index
      %258 = memref.load %arg8[%c21_116] : memref<32xf32, #tpu.memory_space<smem>>
      %259 = math.tanh %257 : vector<8x10xf32>
      %260 = vector.broadcast %258 : f32 to vector<8x10xf32>
      %261 = arith.mulf %260, %259 : vector<8x10xf32>
      %262 = arith.addf %251, %261 : vector<8x10xf32>
      %c0_117 = arith.constant 0 : index
      %c22 = arith.constant 22 : index
      %263 = vector.load %arg10[%c0_117, %c22] : memref<8x32xf32, #tpu.memory_space<vmem>>, vector<8x1xf32>
      %c0_118 = arith.constant 0 : index
      %c22_119 = arith.constant 22 : index
      %c0_120 = arith.constant 0 : index
      %264 = vector.load %arg4[%c0_118, %c22_119, %c0_120] : memref<1x32x10xf32, #tpu.memory_space<vmem>>, vector<1x1x10xf32>
      %265 = vector.shape_cast %264 : vector<1x1x10xf32> to vector<1x10xf32>
      %266 = vector.broadcast %263 : vector<8x1xf32> to vector<8x10xf32>
      %267 = vector.broadcast %265 : vector<1x10xf32> to vector<8x10xf32>
      %268 = arith.addf %266, %267 : vector<8x10xf32>
      %c22_121 = arith.constant 22 : index
      %269 = memref.load %arg8[%c22_121] : memref<32xf32, #tpu.memory_space<smem>>
      %270 = math.tanh %268 : vector<8x10xf32>
      %271 = vector.broadcast %269 : f32 to vector<8x10xf32>
      %272 = arith.mulf %271, %270 : vector<8x10xf32>
      %273 = arith.addf %262, %272 : vector<8x10xf32>
      %c0_122 = arith.constant 0 : index
      %c23 = arith.constant 23 : index
      %274 = vector.load %arg10[%c0_122, %c23] : memref<8x32xf32, #tpu.memory_space<vmem>>, vector<8x1xf32>
      %c0_123 = arith.constant 0 : index
      %c23_124 = arith.constant 23 : index
      %c0_125 = arith.constant 0 : index
      %275 = vector.load %arg4[%c0_123, %c23_124, %c0_125] : memref<1x32x10xf32, #tpu.memory_space<vmem>>, vector<1x1x10xf32>
      %276 = vector.shape_cast %275 : vector<1x1x10xf32> to vector<1x10xf32>
      %277 = vector.broadcast %274 : vector<8x1xf32> to vector<8x10xf32>
      %278 = vector.broadcast %276 : vector<1x10xf32> to vector<8x10xf32>
      %279 = arith.addf %277, %278 : vector<8x10xf32>
      %c23_126 = arith.constant 23 : index
      %280 = memref.load %arg8[%c23_126] : memref<32xf32, #tpu.memory_space<smem>>
      %281 = math.tanh %279 : vector<8x10xf32>
      %282 = vector.broadcast %280 : f32 to vector<8x10xf32>
      %283 = arith.mulf %282, %281 : vector<8x10xf32>
      %284 = arith.addf %273, %283 : vector<8x10xf32>
      %c0_127 = arith.constant 0 : index
      %c24 = arith.constant 24 : index
      %285 = vector.load %arg10[%c0_127, %c24] : memref<8x32xf32, #tpu.memory_space<vmem>>, vector<8x1xf32>
      %c0_128 = arith.constant 0 : index
      %c24_129 = arith.constant 24 : index
      %c0_130 = arith.constant 0 : index
      %286 = vector.load %arg4[%c0_128, %c24_129, %c0_130] : memref<1x32x10xf32, #tpu.memory_space<vmem>>, vector<1x1x10xf32>
      %287 = vector.shape_cast %286 : vector<1x1x10xf32> to vector<1x10xf32>
      %288 = vector.broadcast %285 : vector<8x1xf32> to vector<8x10xf32>
      %289 = vector.broadcast %287 : vector<1x10xf32> to vector<8x10xf32>
      %290 = arith.addf %288, %289 : vector<8x10xf32>
      %c24_131 = arith.constant 24 : index
      %291 = memref.load %arg8[%c24_131] : memref<32xf32, #tpu.memory_space<smem>>
      %292 = math.tanh %290 : vector<8x10xf32>
      %293 = vector.broadcast %291 : f32 to vector<8x10xf32>
      %294 = arith.mulf %293, %292 : vector<8x10xf32>
      %295 = arith.addf %284, %294 : vector<8x10xf32>
      %c0_132 = arith.constant 0 : index
      %c25 = arith.constant 25 : index
      %296 = vector.load %arg10[%c0_132, %c25] : memref<8x32xf32, #tpu.memory_space<vmem>>, vector<8x1xf32>
      %c0_133 = arith.constant 0 : index
      %c25_134 = arith.constant 25 : index
      %c0_135 = arith.constant 0 : index
      %297 = vector.load %arg4[%c0_133, %c25_134, %c0_135] : memref<1x32x10xf32, #tpu.memory_space<vmem>>, vector<1x1x10xf32>
      %298 = vector.shape_cast %297 : vector<1x1x10xf32> to vector<1x10xf32>
      %299 = vector.broadcast %296 : vector<8x1xf32> to vector<8x10xf32>
      %300 = vector.broadcast %298 : vector<1x10xf32> to vector<8x10xf32>
      %301 = arith.addf %299, %300 : vector<8x10xf32>
      %c25_136 = arith.constant 25 : index
      %302 = memref.load %arg8[%c25_136] : memref<32xf32, #tpu.memory_space<smem>>
      %303 = math.tanh %301 : vector<8x10xf32>
      %304 = vector.broadcast %302 : f32 to vector<8x10xf32>
      %305 = arith.mulf %304, %303 : vector<8x10xf32>
      %306 = arith.addf %295, %305 : vector<8x10xf32>
      %c0_137 = arith.constant 0 : index
      %c26 = arith.constant 26 : index
      %307 = vector.load %arg10[%c0_137, %c26] : memref<8x32xf32, #tpu.memory_space<vmem>>, vector<8x1xf32>
      %c0_138 = arith.constant 0 : index
      %c26_139 = arith.constant 26 : index
      %c0_140 = arith.constant 0 : index
      %308 = vector.load %arg4[%c0_138, %c26_139, %c0_140] : memref<1x32x10xf32, #tpu.memory_space<vmem>>, vector<1x1x10xf32>
      %309 = vector.shape_cast %308 : vector<1x1x10xf32> to vector<1x10xf32>
      %310 = vector.broadcast %307 : vector<8x1xf32> to vector<8x10xf32>
      %311 = vector.broadcast %309 : vector<1x10xf32> to vector<8x10xf32>
      %312 = arith.addf %310, %311 : vector<8x10xf32>
      %c26_141 = arith.constant 26 : index
      %313 = memref.load %arg8[%c26_141] : memref<32xf32, #tpu.memory_space<smem>>
      %314 = math.tanh %312 : vector<8x10xf32>
      %315 = vector.broadcast %313 : f32 to vector<8x10xf32>
      %316 = arith.mulf %315, %314 : vector<8x10xf32>
      %317 = arith.addf %306, %316 : vector<8x10xf32>
      %c0_142 = arith.constant 0 : index
      %c27 = arith.constant 27 : index
      %318 = vector.load %arg10[%c0_142, %c27] : memref<8x32xf32, #tpu.memory_space<vmem>>, vector<8x1xf32>
      %c0_143 = arith.constant 0 : index
      %c27_144 = arith.constant 27 : index
      %c0_145 = arith.constant 0 : index
      %319 = vector.load %arg4[%c0_143, %c27_144, %c0_145] : memref<1x32x10xf32, #tpu.memory_space<vmem>>, vector<1x1x10xf32>
      %320 = vector.shape_cast %319 : vector<1x1x10xf32> to vector<1x10xf32>
      %321 = vector.broadcast %318 : vector<8x1xf32> to vector<8x10xf32>
      %322 = vector.broadcast %320 : vector<1x10xf32> to vector<8x10xf32>
      %323 = arith.addf %321, %322 : vector<8x10xf32>
      %c27_146 = arith.constant 27 : index
      %324 = memref.load %arg8[%c27_146] : memref<32xf32, #tpu.memory_space<smem>>
      %325 = math.tanh %323 : vector<8x10xf32>
      %326 = vector.broadcast %324 : f32 to vector<8x10xf32>
      %327 = arith.mulf %326, %325 : vector<8x10xf32>
      %328 = arith.addf %317, %327 : vector<8x10xf32>
      %c0_147 = arith.constant 0 : index
      %c28 = arith.constant 28 : index
      %329 = vector.load %arg10[%c0_147, %c28] : memref<8x32xf32, #tpu.memory_space<vmem>>, vector<8x1xf32>
      %c0_148 = arith.constant 0 : index
      %c28_149 = arith.constant 28 : index
      %c0_150 = arith.constant 0 : index
      %330 = vector.load %arg4[%c0_148, %c28_149, %c0_150] : memref<1x32x10xf32, #tpu.memory_space<vmem>>, vector<1x1x10xf32>
      %331 = vector.shape_cast %330 : vector<1x1x10xf32> to vector<1x10xf32>
      %332 = vector.broadcast %329 : vector<8x1xf32> to vector<8x10xf32>
      %333 = vector.broadcast %331 : vector<1x10xf32> to vector<8x10xf32>
      %334 = arith.addf %332, %333 : vector<8x10xf32>
      %c28_151 = arith.constant 28 : index
      %335 = memref.load %arg8[%c28_151] : memref<32xf32, #tpu.memory_space<smem>>
      %336 = math.tanh %334 : vector<8x10xf32>
      %337 = vector.broadcast %335 : f32 to vector<8x10xf32>
      %338 = arith.mulf %337, %336 : vector<8x10xf32>
      %339 = arith.addf %328, %338 : vector<8x10xf32>
      %c0_152 = arith.constant 0 : index
      %c29 = arith.constant 29 : index
      %340 = vector.load %arg10[%c0_152, %c29] : memref<8x32xf32, #tpu.memory_space<vmem>>, vector<8x1xf32>
      %c0_153 = arith.constant 0 : index
      %c29_154 = arith.constant 29 : index
      %c0_155 = arith.constant 0 : index
      %341 = vector.load %arg4[%c0_153, %c29_154, %c0_155] : memref<1x32x10xf32, #tpu.memory_space<vmem>>, vector<1x1x10xf32>
      %342 = vector.shape_cast %341 : vector<1x1x10xf32> to vector<1x10xf32>
      %343 = vector.broadcast %340 : vector<8x1xf32> to vector<8x10xf32>
      %344 = vector.broadcast %342 : vector<1x10xf32> to vector<8x10xf32>
      %345 = arith.addf %343, %344 : vector<8x10xf32>
      %c29_156 = arith.constant 29 : index
      %346 = memref.load %arg8[%c29_156] : memref<32xf32, #tpu.memory_space<smem>>
      %347 = math.tanh %345 : vector<8x10xf32>
      %348 = vector.broadcast %346 : f32 to vector<8x10xf32>
      %349 = arith.mulf %348, %347 : vector<8x10xf32>
      %350 = arith.addf %339, %349 : vector<8x10xf32>
      %c0_157 = arith.constant 0 : index
      %c30 = arith.constant 30 : index
      %351 = vector.load %arg10[%c0_157, %c30] : memref<8x32xf32, #tpu.memory_space<vmem>>, vector<8x1xf32>
      %c0_158 = arith.constant 0 : index
      %c30_159 = arith.constant 30 : index
      %c0_160 = arith.constant 0 : index
      %352 = vector.load %arg4[%c0_158, %c30_159, %c0_160] : memref<1x32x10xf32, #tpu.memory_space<vmem>>, vector<1x1x10xf32>
      %353 = vector.shape_cast %352 : vector<1x1x10xf32> to vector<1x10xf32>
      %354 = vector.broadcast %351 : vector<8x1xf32> to vector<8x10xf32>
      %355 = vector.broadcast %353 : vector<1x10xf32> to vector<8x10xf32>
      %356 = arith.addf %354, %355 : vector<8x10xf32>
      %c30_161 = arith.constant 30 : index
      %357 = memref.load %arg8[%c30_161] : memref<32xf32, #tpu.memory_space<smem>>
      %358 = math.tanh %356 : vector<8x10xf32>
      %359 = vector.broadcast %357 : f32 to vector<8x10xf32>
      %360 = arith.mulf %359, %358 : vector<8x10xf32>
      %361 = arith.addf %350, %360 : vector<8x10xf32>
      %c0_162 = arith.constant 0 : index
      %c31 = arith.constant 31 : index
      %362 = vector.load %arg10[%c0_162, %c31] : memref<8x32xf32, #tpu.memory_space<vmem>>, vector<8x1xf32>
      %c0_163 = arith.constant 0 : index
      %c31_164 = arith.constant 31 : index
      %c0_165 = arith.constant 0 : index
      %363 = vector.load %arg4[%c0_163, %c31_164, %c0_165] : memref<1x32x10xf32, #tpu.memory_space<vmem>>, vector<1x1x10xf32>
      %364 = vector.shape_cast %363 : vector<1x1x10xf32> to vector<1x10xf32>
      %365 = vector.broadcast %362 : vector<8x1xf32> to vector<8x10xf32>
      %366 = vector.broadcast %364 : vector<1x10xf32> to vector<8x10xf32>
      %367 = arith.addf %365, %366 : vector<8x10xf32>
      %c31_166 = arith.constant 31 : index
      %368 = memref.load %arg8[%c31_166] : memref<32xf32, #tpu.memory_space<smem>>
      %369 = math.tanh %367 : vector<8x10xf32>
      %370 = vector.broadcast %368 : f32 to vector<8x10xf32>
      %371 = arith.mulf %370, %369 : vector<8x10xf32>
      %372 = arith.addf %361, %371 : vector<8x10xf32>
      %373 = vector.broadcast %10 : i32 to vector<8x10xi32>
      %374 = arith.cmpi slt, %6, %373 : vector<8x10xi32>
      %cst_167 = arith.constant -1.000000e+06 : f32
      %375 = vector.broadcast %cst_167 : f32 to vector<8x10xf32>
      %376 = arith.select %374, %372, %375 : vector<8x10xi1>, vector<8x10xf32>
      %c0_168 = arith.constant 0 : index
      %c0_169 = arith.constant 0 : index
      %377 = vector.load %arg11[%c0_168, %c0_169] : memref<8x1xf32, #tpu.memory_space<vmem>>, vector<8x1xf32>
      %cst_170 = arith.constant dense<0xFF800000> : vector<8xf32>
      %378 = vector.multi_reduction <maximumf>, %376, %cst_170 [1] : vector<8x10xf32> to vector<8xf32>
      %379 = vector.shape_cast %378 : vector<8xf32> to vector<8x1xf32>
      %380 = arith.maximumf %377, %379 : vector<8x1xf32>
      %381 = arith.subf %377, %380 : vector<8x1xf32>
      %382 = math.exp %381 : vector<8x1xf32>
      %383 = vector.broadcast %380 : vector<8x1xf32> to vector<8x10xf32>
      %384 = arith.subf %376, %383 : vector<8x10xf32>
      %385 = math.exp %384 : vector<8x10xf32>
      %c0_171 = arith.constant 0 : index
      %c0_172 = arith.constant 0 : index
      %386 = vector.load %arg12[%c0_171, %c0_172] : memref<8x1xf32, #tpu.memory_space<vmem>>, vector<8x1xf32>
      %387 = arith.mulf %382, %386 : vector<8x1xf32>
      %cst_173 = arith.constant dense<0.000000e+00> : vector<8xf32>
      %388 = vector.multi_reduction <add>, %385, %cst_173 [1] : vector<8x10xf32> to vector<8xf32>
      %389 = vector.shape_cast %388 : vector<8xf32> to vector<8x1xf32>
      %390 = arith.addf %387, %389 : vector<8x1xf32>
      %c0_174 = arith.constant 0 : index
      %c0_175 = arith.constant 0 : index
      %391 = vector.load %arg12[%c0_174, %c0_175] : memref<8x1xf32, #tpu.memory_space<vmem>>, vector<8x1xf32>
      tpu.vector_store %arg12[%c0_174, %c0_175], %390 {strides = array<i32>} : memref<8x1xf32, #tpu.memory_space<vmem>>, vector<8x1xf32>,
      %c0_176 = arith.constant 0 : index
      %c0_177 = arith.constant 0 : index
      %392 = vector.load %arg13[%c0_176, %c0_177] : memref<8x128xf32, #tpu.memory_space<vmem>>, vector<8x128xf32>
      %393 = vector.broadcast %382 : vector<8x1xf32> to vector<8x128xf32>
      %394 = arith.mulf %393, %392 : vector<8x128xf32>
      %c0_178 = arith.constant 0 : index
      %c0_179 = arith.constant 0 : index
      %c0_180 = arith.constant 0 : index
      %395 = vector.load %arg5[%c0_178, %c0_179, %c0_180] : memref<1x10x128xf32, #tpu.memory_space<vmem>>, vector<1x10x128xf32>
      %396 = vector.shape_cast %395 : vector<1x10x128xf32> to vector<10x128xf32>
      %cst_181 = arith.constant dense<0.000000e+00> : vector<8x128xf32>
      %397 = tpu.matmul %385, %396, %cst_181 {dimension_numbers = #tpu.dot_dimension_numbers<[1], [0], [0], [1], [0, 0, 1, 1], [], []>} : vector<8x10xf32>, vector<10x128xf32>, vector<8x128xf32> -> vector<8x128xf32>
      %398 = arith.addf %394, %397 : vector<8x128xf32>
      %c0_182 = arith.constant 0 : index
      %c0_183 = arith.constant 0 : index
      %399 = vector.load %arg13[%c0_182, %c0_183] : memref<8x128xf32, #tpu.memory_space<vmem>>, vector<8x128xf32>
      tpu.vector_store %arg13[%c0_182, %c0_183], %398 {strides = array<i32>} : memref<8x128xf32, #tpu.memory_space<vmem>>, vector<8x128xf32>,
      %c0_184 = arith.constant 0 : index
      %c0_185 = arith.constant 0 : index
      %400 = vector.load %arg11[%c0_184, %c0_185] : memref<8x1xf32, #tpu.memory_space<vmem>>, vector<8x1xf32>
      tpu.vector_store %arg11[%c0_184, %c0_185], %380 {strides = array<i32>} : memref<8x1xf32, #tpu.memory_space<vmem>>, vector<8x1xf32>,
    } else {
    }
    %c0_i32_5 = arith.constant 0 : i32
    %17 = arith.cmpi eq, %arg2, %c0_i32_5 : i32
    %18 = arith.extui %17 : i1 to i32
    %c0_i32_6 = arith.constant 0 : i32
    %19 = arith.cmpi ne, %18, %c0_i32_6 : i32
    scf.if %19 {
      %c0 = arith.constant 0 : index
      %c0_7 = arith.constant 0 : index
      %20 = vector.load %arg12[%c0, %c0_7] : memref<8x1xf32, #tpu.memory_space<vmem>>, vector<8x1xf32>
      %21 = tpu.reciprocal %20 {approx = true} : vector<8x1xf32> -> vector<8x1xf32>
      %c0_8 = arith.constant 0 : index
      %c0_9 = arith.constant 0 : index
      %22 = vector.load %arg13[%c0_8, %c0_9] : memref<8x128xf32, #tpu.memory_space<vmem>>, vector<8x128xf32>
      %23 = vector.broadcast %21 : vector<8x1xf32> to vector<8x128xf32>
      %24 = arith.mulf %22, %23 : vector<8x128xf32>
      %c0_10 = arith.constant 0 : index
      %c0_11 = arith.constant 0 : index
      %25 = vector.load %arg9[%c0_10, %c0_11] : memref<8x128xf32, #tpu.memory_space<vmem>>, vector<8x128xf32>
      tpu.vector_store %arg9[%c0_10, %c0_11], %24 {strides = array<i32>} : memref<8x128xf32, #tpu.memory_space<vmem>>, vector<8x128xf32>,
    } else {
    }
    return
  }
  func.func @transform_0(%arg0: i32, %arg1: i32, %arg2: i32) -> (i32, i32) {
    %c1_i32 = arith.constant 1 : i32
    %0 = arith.muli %arg0, %c1_i32 : i32
    %1 = arith.addi %0, %arg1 : i32
    %c0_i32 = arith.constant 0 : i32
    %c0_i32_0 = arith.constant 0 : i32
    return %1, %c0_i32 : i32, i32
  }
  func.func @transform_1(%arg0: i32, %arg1: i32, %arg2: i32) -> (i32, i32, i32) {
    %c0_i32 = arith.constant 0 : i32
    %c0_i32_0 = arith.constant 0 : i32
    return %arg0, %c0_i32, %arg2 : i32, i32, i32
  }
  func.func @transform_2(%arg0: i32, %arg1: i32, %arg2: i32) -> (i32, i32, i32) {
    %c0_i32 = arith.constant 0 : i32
    %c0_i32_0 = arith.constant 0 : i32
    return %arg0, %arg2, %c0_i32 : i32, i32, i32
  }
  func.func @transform_3(%arg0: i32, %arg1: i32, %arg2: i32) -> i32 {
    %c0_i32 = arith.constant 0 : i32
    %c0_i32_0 = arith.constant 0 : i32
    return %c0_i32 : i32
  }
  func.func @transform_4(%arg0: i32, %arg1: i32, %arg2: i32) -> (i32, i32) {
    %c0_i32 = arith.constant 0 : i32
    %c0_i32_0 = arith.constant 0 : i32
    %c0_i32_1 = arith.constant 0 : i32
    return %c0_i32, %c0_i32_0 : i32, i32
  }
  func.func @transform_5(%arg0: i32, %arg1: i32, %arg2: i32) -> i32 {
    %c0_i32 = arith.constant 0 : i32
    %c0_i32_0 = arith.constant 0 : i32
    return %c0_i32 : i32
  }
  func.func @transform_6(%arg0: i32, %arg1: i32, %arg2: i32) -> (i32, i32) {
    %c1_i32 = arith.constant 1 : i32
    %0 = arith.muli %arg0, %c1_i32 : i32
    %1 = arith.addi %0, %arg1 : i32
    %c0_i32 = arith.constant 0 : i32
    %c0_i32_0 = arith.constant 0 : i32
    return %1, %c0_i32 : i32, i32
  }
}

</mosaic_0001>

<llo_original>
// kernel: additive_attention.1
$region0: #{additive_attention.1}
  #allocation0 [shape = 'u32[]', space=smem, size = 0x4, offset = 0x4, fixed_abs, tag = 'smem constant byte address 0x4 - core index']
  #allocation1 [shape = 'u32[144,128]{1,0:T(1,128)}', space=vmem, size = 0x12000, scoped, tag = 'internal scratch']
  #allocation2 [shape = 'f32[8,32]{1,0:T(8,128)}', space=vmem, size = 0x1000, scoped, tag = 'scratch operand']
  #allocation3 [shape = 'f32[8,1]{1,0:T(8,128)}', space=vmem, size = 0x1000, scoped, tag = 'scratch operand']
  #allocation4 [shape = 'f32[8,1]{1,0:T(8,128)}', space=vmem, size = 0x1000, scoped, tag = 'scratch operand']
  #allocation5 [shape = 'f32[8,128]{1,0:T(8,128)}', space=vmem, size = 0x1000, scoped, tag = 'scratch operand']
  %s0 = inlined_call_operand.vmem [shape: f32[16,16], index: 0, kind: input, shape index: {}]
  %s1 = inlined_call_operand.vmem [shape: f32[2,32,10], index: 1, kind: input, shape index: {}]
  %s2 = inlined_call_operand.vmem [shape: f32[2,10,128], index: 2, kind: input, shape index: {}]
  %s3 = inlined_call_operand.vmem [shape: s32[2], index: 3, kind: input, shape index: {}]
  %s4 = inlined_call_operand.vmem [shape: f32[16,32], index: 4, kind: input, shape index: {}]
  %s5 = inlined_call_operand.vmem [shape: f32[32], index: 5, kind: input, shape index: {}]
  %s6 = inlined_call_operand.vmem [shape: f32[16,128], index: 6, kind: output, shape index: {}]
  %s7 = sld [smem:[#allocation0]]
  $region77: #{additive_attention.1} parent=0
    _
  %s9 = ssub.s32 1, %s7
  %s10 = scalar_select 0, %s9, %s7
  $region1: #{additive_attention.1} parent=0
    #allocation6 [shape = 'u8[512]{0}', space=smem, size = 0x200, scoped, tag = 'input window, operand 3, single buffered']
    #allocation7 [shape = 's32[2]{0}', space=sflag, size = 0x8, scoped, tag = 'scoped memory for additive_attention.1']
    #allocation8 [shape = 'u8[512]{0}', space=smem, size = 0x200, scoped, tag = 'input window, operand 5, single buffered']
    #allocation9 [shape = 's32[1]{0}', space=sflag, size = 0x4, scoped, tag = 'scoped memory for additive_attention.1']
    %11 = vsyncpa [#allocation7], 0
    %12 = vsyncpa [#allocation9], 0
    loop: start=0, step=1, limit=4
    $region2: #{additive_attention.1} parent=1 // loop_pre_header
      _
    $region3: #{additive_attention.1} parent=1 // loop_header
      %s14 = sphi 0, %s18
      %p15 = scmp.ge.s32.totalorder %s14, 4
      %s21 = sphi 0, %s40
      %s22 = sphi 0, %s36
      %s23 = sphi 0, %s32
      %s24 = sphi 0, %s21
      %s25 = sphi 0, %s22
      %s26 = sphi 0, %s23
      %s27 = sphi 0, %s24
      %s28 = sphi 0, %s25
      %s29 = sphi 0, %s26
      %s45 = sphi 0, %s47
      %s48 = sphi 0, %s45
      %s49 = sphi 0, %s48
      %s65 = sphi 0, %s49
      %s73 = sphi 0, %s75
      %s76 = sphi 0, %s73
      %s77 = sphi 0, %s76
      %s93 = sphi 0, %s77
      %s101 = sphi 0, %s103
      %s104 = sphi 0, %s101
      %s105 = sphi 0, %s104
      %s121 = sphi 0, %s105
      %s125 = sphi 0, %s125
      %s127 = sphi 0, %s125
      %s128 = sphi 0, %s127
      %s142 = sphi 0, %s128
      %s146 = sphi 0, %s146
      %s148 = sphi 0, %s146
      %s149 = sphi 0, %s148
      %s163 = sphi 0, %s149
      %s167 = sphi 0, %s167
      %s169 = sphi 0, %s167
      %s170 = sphi 0, %s169
      %s184 = sphi 0, %s170
      %s192 = sphi 0, %s194
      %s195 = sphi 0, %s192
      %s196 = sphi 0, %s195
      %s212 = sphi 0, %s196
    $region4: #{additive_attention.1} parent=1 // loop_header_branch
      %17 = sbr.rel (%p15) target = $region8
    $region5: #{additive_attention.1} parent=1 // loop_body
      %s19 = ssub.s32 %s14, 1
      %s20 = ssub.s32 %s14, 2
      %s30 = sadd.s32 1, %s23
      %p31 = scmp.ge.s32.totalorder %s30, 1
      %s32 = scalar_select %p31, 0, %s30
      %s33 = sadd.s32 1, %s22
      %s34 = scalar_select %p31, %s33, %s22
      %p35 = scmp.ge.s32.totalorder %s34, 1
      %s36 = scalar_select %p35, 0, %s34
      %s37 = sadd.s32 1, %s21
      %s38 = scalar_select %p35, %s37, %s21
      %p39 = scmp.ge.s32.totalorder %s38, 2
      %s40 = scalar_select %p39, 0, %s38
      %s41 = sadd.s32 %s21, %s22
      %s42 = sadd.s32 %s40, %s36
      %s43 = ssub.s32 %s41, %s42
      %p44 = scmp.eq.s32.totalorder %s43, 0
      %s46 = sadd.s32 %s45, 1
      %s47 = scalar_select %p44, %s45, %s46
      %p50 = pneg %p44
      %p51 = scmp.eq.s32.totalorder %s14, 1
      %p52 = por %p50, %p51
      %p53 = scmp.ne.s32.totalorder %s45, %s48
      %p54 = scmp.eq.s32.totalorder %s14, 0
      %p55 = por %p53, %p54
      %p56 = scmp.ne.s32.totalorder %s45, %s48
      %p57 = scmp.eq.s32.totalorder %s19, 1
      %p58 = por %p56, %p57
      %p59 = scmp.ne.s32.totalorder %s48, %s49
      %p60 = scmp.eq.s32.totalorder %s19, 0
      %p61 = por %p59, %p60
      %p62 = scmp.ne.s32.totalorder %s48, %s49
      %p63 = scmp.eq.s32.totalorder %s20, 1
      %p64 = por %p62, %p63
      %p66 = scmp.ne.s32.totalorder %s49, %s65
      %p67 = scmp.eq.s32.totalorder %s20, 0
      %p68 = por %p66, %p67
      %s69 = ssub.s32 %s21, %s40
      %s70 = ssub.s32 %s23, %s32
      %s71 = sor.u32 %s69, %s70
      %p72 = scmp.eq.s32.totalorder %s71, 0
      %s74 = sadd.s32 %s73, 1
      %s75 = scalar_select %p72, %s73, %s74
      %p78 = pneg %p72
      %p79 = scmp.eq.s32.totalorder %s14, 1
      %p80 = por %p78, %p79
      %p81 = scmp.ne.s32.totalorder %s73, %s76
      %p82 = scmp.eq.s32.totalorder %s14, 0
      %p83 = por %p81, %p82
      %p84 = scmp.ne.s32.totalorder %s73, %s76
      %p85 = scmp.eq.s32.totalorder %s19, 1
      %p86 = por %p84, %p85
      %p87 = scmp.ne.s32.totalorder %s76, %s77
      %p88 = scmp.eq.s32.totalorder %s19, 0
      %p89 = por %p87, %p88
      %p90 = scmp.ne.s32.totalorder %s76, %s77
      %p91 = scmp.eq.s32.totalorder %s20, 1
      %p92 = por %p90, %p91
      %p94 = scmp.ne.s32.totalorder %s77, %s93
      %p95 = scmp.eq.s32.totalorder %s20, 0
      %p96 = por %p94, %p95
      %s97 = ssub.s32 %s21, %s40
      %s98 = ssub.s32 %s23, %s32
      %s99 = sor.u32 %s97, %s98
      %p100 = scmp.eq.s32.totalorder %s99, 0
      %s102 = sadd.s32 %s101, 1
      %s103 = scalar_select %p100, %s101, %s102
      %p106 = pneg %p100
      %p107 = scmp.eq.s32.totalorder %s14, 1
      %p108 = por %p106, %p107
      %p109 = scmp.ne.s32.totalorder %s101, %s104
      %p110 = scmp.eq.s32.totalorder %s14, 0
      %p111 = por %p109, %p110
      %p112 = scmp.ne.s32.totalorder %s101, %s104
      %p113 = scmp.eq.s32.totalorder %s19, 1
      %p114 = por %p112, %p113
      %p115 = scmp.ne.s32.totalorder %s104, %s105
      %p116 = scmp.eq.s32.totalorder %s19, 0
      %p117 = por %p115, %p116
      %p118 = scmp.ne.s32.totalorder %s104, %s105
      %p119 = scmp.eq.s32.totalorder %s20, 1
      %p120 = por %p118, %p119
      %p122 = scmp.ne.s32.totalorder %s105, %s121
      %p123 = scmp.eq.s32.totalorder %s20, 0
      %p124 = por %p122, %p123
      %s126 = sadd.s32 %s125, 1
      %p129 = scmp.eq.s32.totalorder %s14, 1
      %p130 = scmp.ne.s32.totalorder %s125, %s127
      %p131 = scmp.eq.s32.totalorder %s14, 0
      %p132 = por %p130, %p131
      %p133 = scmp.ne.s32.totalorder %s125, %s127
      %p134 = scmp.eq.s32.totalorder %s19, 1
      %p135 = por %p133, %p134
      %p136 = scmp.ne.s32.totalorder %s127, %s128
      %p137 = scmp.eq.s32.totalorder %s19, 0
      %p138 = por %p136, %p137
      %p139 = scmp.ne.s32.totalorder %s127, %s128
      %p140 = scmp.eq.s32.totalorder %s20, 1
      %p141 = por %p139, %p140
      %p143 = scmp.ne.s32.totalorder %s128, %s142
      %p144 = scmp.eq.s32.totalorder %s20, 0
      %p145 = por %p143, %p144
      %s147 = sadd.s32 %s146, 1
      %p150 = scmp.eq.s32.totalorder %s14, 1
      %p151 = scmp.ne.s32.totalorder %s146, %s148
      %p152 = scmp.eq.s32.totalorder %s14, 0
      %p153 = por %p151, %p152
      %p154 = scmp.ne.s32.totalorder %s146, %s148
      %p155 = scmp.eq.s32.totalorder %s19, 1
      %p156 = por %p154, %p155
      %p157 = scmp.ne.s32.totalorder %s148, %s149
      %p158 = scmp.eq.s32.totalorder %s19, 0
      %p159 = por %p157, %p158
      %p160 = scmp.ne.s32.totalorder %s148, %s149
      %p161 = scmp.eq.s32.totalorder %s20, 1
      %p162 = por %p160, %p161
      %p164 = scmp.ne.s32.totalorder %s149, %s163
      %p165 = scmp.eq.s32.totalorder %s20, 0
      %p166 = por %p164, %p165
      %s168 = sadd.s32 %s167, 1
      %p171 = scmp.eq.s32.totalorder %s14, 1
      %p172 = scmp.ne.s32.totalorder %s167, %s169
      %p173 = scmp.eq.s32.totalorder %s14, 0
      %p174 = por %p172, %p173
      %p175 = scmp.ne.s32.totalorder %s167, %s169
      %p176 = scmp.eq.s32.totalorder %s19, 1
      %p177 = por %p175, %p176
      %p178 = scmp.ne.s32.totalorder %s169, %s170
      %p179 = scmp.eq.s32.totalorder %s19, 0
      %p180 = por %p178, %p179
      %p181 = scmp.ne.s32.totalorder %s169, %s170
      %p182 = scmp.eq.s32.totalorder %s20, 1
      %p183 = por %p181, %p182
      %p185 = scmp.ne.s32.totalorder %s170, %s184
      %p186 = scmp.eq.s32.totalorder %s20, 0
      %p187 = por %p185, %p186
      %s188 = sadd.s32 %s21, %s22
      %s189 = sadd.s32 %s40, %s36
      %s190 = ssub.s32 %s188, %s189
      %p191 = scmp.eq.s32.totalorder %s190, 0
      %s193 = sadd.s32 %s192, 1
      %s194 = scalar_select %p191, %s192, %s193
      %p197 = pneg %p191
      %p198 = scmp.eq.s32.totalorder %s14, 1
      %p199 = por %p197, %p198
      %p200 = scmp.ne.s32.totalorder %s192, %s195
      %p201 = scmp.eq.s32.totalorder %s14, 0
      %p202 = por %p200, %p201
      %p203 = scmp.ne.s32.totalorder %s192, %s195
      %p204 = scmp.eq.s32.totalorder %s19, 1
      %p205 = por %p203, %p204
      %p206 = scmp.ne.s32.totalorder %s195, %s196
      %p207 = scmp.eq.s32.totalorder %s19, 0
      %p208 = por %p206, %p207
      %p209 = scmp.ne.s32.totalorder %s195, %s196
      %p210 = scmp.eq.s32.totalorder %s20, 1
      %p211 = por %p209, %p210
      %p213 = scmp.ne.s32.totalorder %s196, %s212
      %p214 = scmp.eq.s32.totalorder %s20, 0
      %p215 = por %p213, %p214
      %p216 = scmp.le.s32.totalorder 1, %s14
      %p217 = scmp.lt.s32.totalorder %s14, 3
      %p218 = pnand %p216, %p217
      %p219 = pneg %p218
      // Predicated region
      $region9: #{additive_attention.1} parent=5 // pred_check
        _
      $region10: #{additive_attention.1} parent=5 // pred_check_branch
        %221 = sbr.rel (%p218) target = $region12
      $region11: #{additive_attention.1} parent=5 // pred_region
        %s222 = ssub.s32 %s14, 1
        // Predicated region
        $region13: #{additive_attention.1} parent=11 // pred_check
          %p223 = pneg %p138
        $region14: #{additive_attention.1} parent=11 // pred_check_branch
          %225 = sbr.rel (%p223) target = $region16
        $region15: #{additive_attention.1} parent=11 // pred_region
          %s227 = ssub.s32 16, 16
          %228 = vsyncadd [#allocation7], %s227
          %s230 = sshll.u32 %s3, 4
          %s231 = int_to_ptr.vmem [resolvable:$true] %s230
          %233 = dma.vmem_to_smem %s231, 16, [#allocation6], [#allocation7]
        $region16: #{additive_attention.1} parent=11 // pred_fallthru
          _
        // Predicated region
        $region17: #{additive_attention.1} parent=11 // pred_check
          %p234 = pneg %p159
        $region18: #{additive_attention.1} parent=11 // pred_check_branch
          %236 = sbr.rel (%p234) target = $region20
        $region19: #{additive_attention.1} parent=11 // pred_region
          _
        $region20: #{additive_attention.1} parent=11 // pred_fallthru
          _
        // Predicated region
        $region21: #{additive_attention.1} parent=11 // pred_check
          %p237 = pneg %p180
        $region22: #{additive_attention.1} parent=11 // pred_check_branch
          %239 = sbr.rel (%p237) target = $region24
        $region23: #{additive_attention.1} parent=11 // pred_region
          %s241 = ssub.s32 16, 16
          %242 = vsyncadd [#allocation9], %s241
          %s244 = sshll.u32 %s5, 4
          %s245 = int_to_ptr.vmem [resolvable:$true] %s244
          %247 = dma.vmem_to_smem %s245, 16, [#allocation8], [#allocation9]
        $region24: #{additive_attention.1} parent=11 // pred_fallthru
          _
      $region12: #{additive_attention.1} parent=5 // pred_fallthru
        _
      %p248 = scmp.lt.s32.totalorder %s14, 2
      // Predicated region
      $region25: #{additive_attention.1} parent=5 // pred_check
        %p249 = pneg %p248
      $region26: #{additive_attention.1} parent=5 // pred_check_branch
        %251 = sbr.rel (%p249) target = $region28
      $region27: #{additive_attention.1} parent=5 // pred_region
        // Predicated region
        $region29: #{additive_attention.1} parent=27 // pred_check
          %p252 = pneg %p55
        $region30: #{additive_attention.1} parent=27 // pred_check_branch
          %254 = sbr.rel (%p252) target = $region32
        $region31: #{additive_attention.1} parent=27 // pred_region
          %s255 = sadd.s32 %s21, %s22
          %p256 = scmp.lt.s32.totalorder %s255, 1
          %s257 = scalar_select %p256, %s255, 1
          %s258 = smul.addr %s257, 8
          %s259 = scalar_lea.vmem %s0, %s258
          %s260 = sadd.s32 %s21, %s22
        $region32: #{additive_attention.1} parent=27 // pred_fallthru
          _
        // Predicated region
        $region33: #{additive_attention.1} parent=27 // pred_check
          %p261 = pneg %p83
        $region34: #{additive_attention.1} parent=27 // pred_check_branch
          %263 = sbr.rel (%p261) target = $region36
        $region35: #{additive_attention.1} parent=27 // pred_region
          %p264 = scmp.lt.s32.totalorder %s21, 1
          %s265 = scalar_select %p264, %s21, 1
          %p266 = scmp.lt.s32.totalorder %s23, 0
          %s267 = scalar_select %p266, %s23, 0
          %s268 = smul.addr %s265, 4
          %s269 = sadd.s32 %s267, %s268
          %s270 = smul.addr %s269, 8
          %s271 = scalar_lea.vmem %s1, %s270
        $region36: #{additive_attention.1} parent=27 // pred_fallthru
          _
        // Predicated region
        $region37: #{additive_attention.1} parent=27 // pred_check
          %p272 = pneg %p111
        $region38: #{additive_attention.1} parent=27 // pred_check_branch
          %274 = sbr.rel (%p272) target = $region40
        $region39: #{additive_attention.1} parent=27 // pred_region
          %s275 = smul.u32 2, %s23
          %p276 = scmp.lt.s32.totalorder %s21, 1
          %s277 = scalar_select %p276, %s21, 1
          %p278 = scmp.lt.s32.totalorder %s275, 1
          %s279 = scalar_select %p278, %s275, 1
          %s280 = smul.addr %s277, 2
          %s281 = sadd.s32 %s279, %s280
          %s282 = smul.addr %s281, 8
          %s283 = scalar_lea.vmem %s2, %s282
          %s284 = smul.u32 2, %s23
        $region40: #{additive_attention.1} parent=27 // pred_fallthru
          _
      $region28: #{additive_attention.1} parent=5 // pred_fallthru
        _
      %p285 = scmp.le.s32.totalorder 1, %s14
      %p286 = scmp.lt.s32.totalorder %s14, 3
      %p287 = pnand %p285, %p286
      %p288 = pneg %p287
      // Predicated region
      $region41: #{additive_attention.1} parent=5 // pred_check
        _
      $region42: #{additive_attention.1} parent=5 // pred_check_branch
        %290 = sbr.rel (%p287) target = $region44
      $region43: #{additive_attention.1} parent=5 // pred_region
        %s291 = ssub.s32 %s14, 1
        // Predicated region
        $region45: #{additive_attention.1} parent=43 // pred_check
          %p292 = pneg %p138
        $region46: #{additive_attention.1} parent=43 // pred_check_branch
          %294 = sbr.rel (%p292) target = $region48
        $region47: #{additive_attention.1} parent=43 // pred_region
          %295 = dma.done [#allocation7], 16
        $region48: #{additive_attention.1} parent=43 // pred_fallthru
          _
        // Predicated region
        $region49: #{additive_attention.1} parent=43 // pred_check
          %p296 = pneg %p180
        $region50: #{additive_attention.1} parent=43 // pred_check_branch
          %298 = sbr.rel (%p296) target = $region52
        $region51: #{additive_attention.1} parent=43 // pred_region
          %299 = dma.done [#allocation9], 16
        $region52: #{additive_attention.1} parent=43 // pred_fallthru
          _
        %300 = sfence
        %s301 = sadd.s32 %s24, %s25
        %p302 = scmp.lt.s32.totalorder %s301, 1
        %s303 = scalar_select %p302, %s301, 1
        %s304 = smul.addr %s303, 8
        %s305 = scalar_lea.vmem %s0, %s304
        %p306 = pneg %p61
        %p307 = pneg %p58
        %p308 = scmp.lt.s32.totalorder %s24, 1
        %s309 = scalar_select %p308, %s24, 1
        %p310 = scmp.lt.s32.totalorder %s26, 0
        %s311 = scalar_select %p310, %s26, 0
        %s312 = smul.addr %s309, 4
        %s313 = sadd.s32 %s311, %s312
        %s314 = smul.addr %s313, 8
        %s315 = scalar_lea.vmem %s1, %s314
        %p316 = pneg %p89
        %p317 = pneg %p86
        %s318 = smul.u32 2, %s26
        %p319 = scmp.lt.s32.totalorder %s24, 1
        %s320 = scalar_select %p319, %s24, 1
        %p321 = scmp.lt.s32.totalorder %s318, 1
        %s322 = scalar_select %p321, %s318, 1
        %s323 = smul.addr %s320, 2
        %s324 = sadd.s32 %s322, %s323
        %s325 = smul.addr %s324, 8
        %s326 = scalar_lea.vmem %s2, %s325
        %p327 = pneg %p117
        %p328 = pneg %p114
        %p329 = pneg %p138
        %p330 = pneg %p135
        %p331 = pneg %p159
        %p332 = pneg %p156
        %p333 = pneg %p180
        %p334 = pneg %p177
        %p335 = pneg %p208
        %p336 = pneg %p205
        %s337 = sadd.s32 %s24, %s25
        %p338 = scmp.lt.s32.totalorder %s337, 1
        %s339 = scalar_select %p338, %s337, 1
        %s340 = smul.addr %s339, 8
        %s341 = scalar_lea.vmem %s6, %s340
        %s342 = sadd.s32 %s24, %s25
        %p343 = scmp.lt.s32.totalorder %s342, 1
        %s344 = scalar_select %p343, %s342, 1
        %s345 = smul.addr %s344, 8
        %s346 = scalar_lea.vmem %s0, %s345
        %s347 = sadd.s32 %s24, %s25
        %p348 = scmp.lt.s32.totalorder %s24, 1
        %s349 = scalar_select %p348, %s24, 1
        %p350 = scmp.lt.s32.totalorder %s26, 0
        %s351 = scalar_select %p350, %s26, 0
        %s352 = smul.addr %s349, 4
        %s353 = sadd.s32 %s351, %s352
        %s354 = smul.addr %s353, 8
        %s355 = scalar_lea.vmem %s1, %s354
        %s356 = smul.u32 2, %s26
        %p357 = scmp.lt.s32.totalorder %s24, 1
        %s358 = scalar_select %p357, %s24, 1
        %p359 = scmp.lt.s32.totalorder %s356, 1
        %s360 = scalar_select %p359, %s356, 1
        %s361 = smul.addr %s358, 2
        %s362 = sadd.s32 %s360, %s361
        %s363 = smul.addr %s362, 8
        %s364 = scalar_lea.vmem %s2, %s363
        %s365 = smul.u32 2, %s26
        %s366 = sadd.s32 %s24, %s25
        %p367 = scmp.lt.s32.totalorder %s366, 1
        %s368 = scalar_select %p367, %s366, 1
        %s369 = smul.addr %s368, 8
        %s370 = scalar_lea.vmem %s6, %s369
        %s371 = sadd.s32 %s24, %s25
        %p372 = scmp.eq.s32.totalorder %s26, 0
        // Predicated region
        $region53: #{additive_attention.1} parent=43 // pred_check
          %p373 = pneg %p372
        $region54: #{additive_attention.1} parent=43 // pred_check_branch
          %375 = sbr.rel (%p373) target = $region56
        $region55: #{additive_attention.1} parent=43 // pred_region
          %v376 = vld [vmem:[%s346] sm:$0xff]
          %v377 = vld [vmem:[%s4] sm:$0xff]
          %v378 = vld [vmem:[%s4 + $0x8] sm:$0xff]
          %vm379 = vcmask 130048
          %v381 = vsel %vm379, %v376, 0
          %383 = vmatprep.subr.mxu0 0.0
          %384 = vmatpush1.msra.mxu0 %v377
          %385 = vmatprep.subr.mxu0 0.0
          %386 = vmatpush1.msra.mxu0 %v378
          %387 = vmatprep.subr.mxu0 0.0
          %388 = vmatpush1.msra.mxu0 0.0
          %389 = vmatprep.subr.mxu0 0.0
          %390 = vmatpush1.msra.mxu0 0.0
          %391 = vmatprep.subr.mxu0 0.0
          %392 = vmatpush1.msra.mxu0 0.0
          %393 = vmatprep.subr.mxu0 0.0
          %394 = vmatpush1.msra.mxu0 0.0
          %395 = vmatprep.subr.mxu0 0.0
          %396 = vmatpush1.msra.mxu0 0.0
          %397 = vmatprep.subr.mxu0 0.0
          %398 = vmatpush1.msra.mxu0 0.0
          %399 = vmatprep.subr.mxu0 0.0
          %400 = vmatpush1.msra.mxu0 0.0
          %401 = vmatprep.subr.mxu0 0.0
          %402 = vmatpush1.msra.mxu0 0.0
          %403 = vmatprep.subr.mxu0 0.0
          %404 = vmatpush1.msra.mxu0 0.0
          %405 = vmatprep.subr.mxu0 0.0
          %406 = vmatpush1.msra.mxu0 0.0
          %407 = vmatprep.subr.mxu0 0.0
          %408 = vmatpush1.msra.mxu0 0.0
          %409 = vmatprep.subr.mxu0 0.0
          %410 = vmatpush1.msra.mxu0 0.0
          %411 = vmatprep.subr.mxu0 0.0
          %412 = vmatpush1.msra.mxu0 0.0
          %413 = vmatprep.subr.mxu0 0.0
          %414 = vmatpush1.msra.mxu0 0.0
          %415 = vmatprep.subr.mxu0 0.0
          %416 = vmatpush1.msra.mxu0 0.0
          %417 = vmatprep.subr.mxu0 0.0
          %418 = vmatpush1.msra.mxu0 0.0
          %419 = vmatprep.subr.mxu0 0.0
          %420 = vmatpush1.msra.mxu0 0.0
          %421 = vmatprep.subr.mxu0 0.0
          %422 = vmatpush1.msra.mxu0 0.0
          %423 = vmatprep.subr.mxu0 0.0
          %424 = vmatpush1.msra.mxu0 0.0
          %425 = vmatprep.subr.mxu0 0.0
          %426 = vmatpush1.msra.mxu0 0.0
          %427 = vmatprep.subr.mxu0 0.0
          %428 = vmatpush1.msra.mxu0 0.0
          %429 = vmatprep.subr.mxu0 0.0
          %430 = vmatpush1.msra.mxu0 0.0
          %431 = vmatprep.subr.mxu0 0.0
          %432 = vmatpush1.msra.mxu0 0.0
          %433 = vmatprep.subr.mxu0 0.0
          %434 = vmatpush1.msra.mxu0 0.0
          %435 = vmatprep.subr.mxu0 0.0
          %436 = vmatpush1.msra.mxu0 0.0
          %437 = vmatprep.subr.mxu0 0.0
          %438 = vmatpush1.msra.mxu0 0.0
          %439 = vmatprep.subr.mxu0 0.0
          %440 = vmatpush1.msra.mxu0 0.0
          %441 = vmatprep.subr.mxu0 0.0
          %442 = vmatpush1.msra.mxu0 0.0
          %443 = vmatprep.subr.mxu0 0.0
          %444 = vmatpush1.msra.mxu0 0.0
          %445 = vmatprep.subr.mxu0 0.0
          %446 = vmatpush1.msra.mxu0 0.0
          %447 = vmatprep.mubr.f32.mxu0 0.0
          %448 = vmatmul.mubr.f32.gmra.mrb[0].mxu0 %v381
          %v449 = vpop.f32.mrb[0].mxu0
          %v450 = vadd.f32 0.0, %v449
          %v451 = vpop.f32.mrb[0].mxu0
          %452 = vdwg.mxu0
          %vm453 = vcmask 261120
          %454 = vst.msk [vmem:[#allocation2] sm:$0xff] %vm453, %v450
          %vm455 = vcmask 7168
          %456 = vst.msk [vmem:[#allocation3] sm:$0xff] %vm455, -inf
          %457 = vst.msk [vmem:[#allocation4] sm:$0xff] %vm455, 0.0
          %458 = vst [vmem:[#allocation5] sm:$0xff] 0.0
        $region56: #{additive_attention.1} parent=43 // pred_fallthru
          _
        %s459 = smul.u32 %s26, 10
        %v460 = vlaneseq
        %v461 = vand.u32 %v460, 127
        %v462 = vstv %s459
        %v463 = vadd.s32 %v462, %v461
        %s464 = sld [smem:[#allocation6 + %s24]]
        %p465 = scmp.lt.s32.totalorder %s459, %s464
        %p466 = scmp.eq.s32.totalorder %s464, 0
        %p467 = por %p465, %p466
        // Predicated region
        $region57: #{additive_attention.1} parent=43 // pred_check
          %p468 = pneg %p467
        $region58: #{additive_attention.1} parent=43 // pred_check_branch
          %470 = sbr.rel (%p468) target = $region60
        $region59: #{additive_attention.1} parent=43 // pred_region
          %v471 = vld [vmem:[#allocation2] sm:$0xff]
          %v472 = vld [vmem:[%s355] sm:$0x1]
          %474 = vset.pattern.permute.xlu0 0
          %475 = vperm.xlu0 %474, %v471
          %v476 = vpop.permute.xlu0 %475
          %v478 = vlaneseq
          %v479 = vshrl.u32 %v478, 7
          %v480 = vsub.s32 0, %v479
          %v481 = vrot.slane %v472, %v480
          %v482 = vadd.f32 %v476, %v481
          %s483 = sld [smem:[#allocation8]]
          %v484 = vtanh.pop %v482
          %v485 = vstv %s483
          %v486 = vmul.f32 %v485, %v484
          %v487 = vadd.f32 %v486, 0.0
          %v488 = vld [vmem:[%s355 + $0x1] sm:$0x1]
          %489 = vset.pattern.permute.xlu0 1
          %490 = vperm.xlu0 %489, %v471
          %v491 = vpop.permute.xlu0 %490
          %v493 = vlaneseq
          %v494 = vshrl.u32 %v493, 7
          %v495 = vsub.s32 0, %v494
          %v496 = vrot.slane %v488, %v495
          %v497 = vadd.f32 %v491, %v496
          %s498 = sld [smem:[#allocation8 + $0x1]]
          %v499 = vtanh.pop %v497
          %v500 = vstv %s498
          %v501 = vmul.f32 %v500, %v499
          %v502 = vadd.f32 %v487, %v501
          %v503 = vld [vmem:[%s355 + $0x2] sm:$0x1]
          %504 = vset.pattern.permute.xlu0 2
          %505 = vperm.xlu0 %504, %v471
          %v506 = vpop.permute.xlu0 %505
          %v508 = vlaneseq
          %v509 = vshrl.u32 %v508, 7
          %v510 = vsub.s32 0, %v509
          %v511 = vrot.slane %v503, %v510
          %v512 = vadd.f32 %v506, %v511
          %s513 = sld [smem:[#allocation8 + $0x2]]
          %v514 = vtanh.pop %v512
          %v515 = vstv %s513
          %v516 = vmul.f32 %v515, %v514
          %v517 = vadd.f32 %v502, %v516
          %v518 = vld [vmem:[%s355 + $0x3] sm:$0x1]
          %519 = vset.pattern.permute.xlu0 3
          %520 = vperm.xlu0 %519, %v471
          %v521 = vpop.permute.xlu0 %520
          %v523 = vlaneseq
          %v524 = vshrl.u32 %v523, 7
          %v525 = vsub.s32 0, %v524
          %v526 = vrot.slane %v518, %v525
          %v527 = vadd.f32 %v521, %v526
          %s528 = sld [smem:[#allocation8 + $0x3]]
          %v529 = vtanh.pop %v527
          %v530 = vstv %s528
          %v531 = vmul.f32 %v530, %v529
          %v532 = vadd.f32 %v517, %v531
          %v533 = vld [vmem:[%s355 + $0x4] sm:$0x1]
          %534 = vset.pattern.permute.xlu0 4
          %535 = vperm.xlu0 %534, %v471
          %v536 = vpop.permute.xlu0 %535
          %v538 = vlaneseq
          %v539 = vshrl.u32 %v538, 7
          %v540 = vsub.s32 0, %v539
          %v541 = vrot.slane %v533, %v540
          %v542 = vadd.f32 %v536, %v541
          %s543 = sld [smem:[#allocation8 + $0x4]]
          %v544 = vtanh.pop %v542
          %v545 = vstv %s543
          %v546 = vmul.f32 %v545, %v544
          %v547 = vadd.f32 %v532, %v546
          %v548 = vld [vmem:[%s355 + $0x5] sm:$0x1]
          %549 = vset.pattern.permute.xlu0 5
          %550 = vperm.xlu0 %549, %v471
          %v551 = vpop.permute.xlu0 %550
          %v553 = vlaneseq
          %v554 = vshrl.u32 %v553, 7
          %v555 = vsub.s32 0, %v554
          %v556 = vrot.slane %v548, %v555
          %v557 = vadd.f32 %v551, %v556
          %s558 = sld [smem:[#allocation8 + $0x5]]
          %v559 = vtanh.pop %v557
          %v560 = vstv %s558
          %v561 = vmul.f32 %v560, %v559
          %v562 = vadd.f32 %v547, %v561
          %v563 = vld [vmem:[%s355 + $0x6] sm:$0x1]
          %564 = vset.pattern.permute.xlu0 6
          %565 = vperm.xlu0 %564, %v471
          %v566 = vpop.permute.xlu0 %565
          %v568 = vlaneseq
          %v569 = vshrl.u32 %v568, 7
          %v570 = vsub.s32 0, %v569
          %v571 = vrot.slane %v563, %v570
          %v572 = vadd.f32 %v566, %v571
          %s573 = sld [smem:[#allocation8 + $0x6]]
          %v574 = vtanh.pop %v572
          %v575 = vstv %s573
          %v576 = vmul.f32 %v575, %v574
          %v577 = vadd.f32 %v562, %v576
          %v578 = vld [vmem:[%s355 + $0x7] sm:$0x1]
          %579 = vset.pattern.permute.xlu0 7
          %580 = vperm.xlu0 %579, %v471
          %v581 = vpop.permute.xlu0 %580
          %v583 = vlaneseq
          %v584 = vshrl.u32 %v583, 7
          %v585 = vsub.s32 0, %v584
          %v586 = vrot.slane %v578, %v585
          %v587 = vadd.f32 %v581, %v586
          %s588 = sld [smem:[#allocation8 + $0x7]]
          %v589 = vtanh.pop %v587
          %v590 = vstv %s588
          %v591 = vmul.f32 %v590, %v589
          %v592 = vadd.f32 %v577, %v591
          %v593 = vld [vmem:[%s355 + $0x8] sm:$0x1]
          %594 = vset.pattern.permute.xlu0 8
          %595 = vperm.xlu0 %594, %v471
          %v596 = vpop.permute.xlu0 %595
          %v598 = vlaneseq
          %v599 = vshrl.u32 %v598, 7
          %v600 = vsub.s32 0, %v599
          %v601 = vrot.slane %v593, %v600
          %v602 = vadd.f32 %v596, %v601
          %s603 = sld [smem:[#allocation8 + $0x8]]
          %v604 = vtanh.pop %v602
          %v605 = vstv %s603
          %v606 = vmul.f32 %v605, %v604
          %v607 = vadd.f32 %v592, %v606
          %v608 = vld [vmem:[%s355 + $0x9] sm:$0x1]
          %609 = vset.pattern.permute.xlu0 9
          %610 = vperm.xlu0 %609, %v471
          %v611 = vpop.permute.xlu0 %610
          %v613 = vlaneseq
          %v614 = vshrl.u32 %v613, 7
          %v615 = vsub.s32 0, %v614
          %v616 = vrot.slane %v608, %v615
          %v617 = vadd.f32 %v611, %v616
          %s618 = sld [smem:[#allocation8 + $0x9]]
          %v619 = vtanh.pop %v617
          %v620 = vstv %s618
          %v621 = vmul.f32 %v620, %v619
          %v622 = vadd.f32 %v607, %v621
          %v623 = vld [vmem:[%s355 + $0xa] sm:$0x1]
          %624 = vset.pattern.permute.xlu0 10
          %625 = vperm.xlu0 %624, %v471
          %v626 = vpop.permute.xlu0 %625
          %v628 = vlaneseq
          %v629 = vshrl.u32 %v628, 7
          %v630 = vsub.s32 0, %v629
          %v631 = vrot.slane %v623, %v630
          %v632 = vadd.f32 %v626, %v631
          %s633 = sld [smem:[#allocation8 + $0xa]]
          %v634 = vtanh.pop %v632
          %v635 = vstv %s633
          %v636 = vmul.f32 %v635, %v634
          %v637 = vadd.f32 %v622, %v636
          %v638 = vld [vmem:[%s355 + $0xb] sm:$0x1]
          %639 = vset.pattern.permute.xlu0 11
          %640 = vperm.xlu0 %639, %v471
          %v641 = vpop.permute.xlu0 %640
          %v643 = vlaneseq
          %v644 = vshrl.u32 %v643, 7
          %v645 = vsub.s32 0, %v644
          %v646 = vrot.slane %v638, %v645
          %v647 = vadd.f32 %v641, %v646
          %s648 = sld [smem:[#allocation8 + $0xb]]
          %v649 = vtanh.pop %v647
          %v650 = vstv %s648
          %v651 = vmul.f32 %v650, %v649
          %v652 = vadd.f32 %v637, %v651
          %v653 = vld [vmem:[%s355 + $0xc] sm:$0x1]
          %654 = vset.pattern.permute.xlu0 12
          %655 = vperm.xlu0 %654, %v471
          %v656 = vpop.permute.xlu0 %655
          %v658 = vlaneseq
          %v659 = vshrl.u32 %v658, 7
          %v660 = vsub.s32 0, %v659
          %v661 = vrot.slane %v653, %v660
          %v662 = vadd.f32 %v656, %v661
          %s663 = sld [smem:[#allocation8 + $0xc]]
          %v664 = vtanh.pop %v662
          %v665 = vstv %s663
          %v666 = vmul.f32 %v665, %v664
          %v667 = vadd.f32 %v652, %v666
          %v668 = vld [vmem:[%s355 + $0xd] sm:$0x1]
          %669 = vset.pattern.permute.xlu0 13
          %670 = vperm.xlu0 %669, %v471
          %v671 = vpop.permute.xlu0 %670
          %v673 = vlaneseq
          %v674 = vshrl.u32 %v673, 7
          %v675 = vsub.s32 0, %v674
          %v676 = vrot.slane %v668, %v675
          %v677 = vadd.f32 %v671, %v676
          %s678 = sld [smem:[#allocation8 + $0xd]]
          %v679 = vtanh.pop %v677
          %v680 = vstv %s678
          %v681 = vmul.f32 %v680, %v679
          %v682 = vadd.f32 %v667, %v681
          %v683 = vld [vmem:[%s355 + $0xe] sm:$0x1]
          %684 = vset.pattern.permute.xlu0 14
          %685 = vperm.xlu0 %684, %v471
          %v686 = vpop.permute.xlu0 %685
          %v688 = vlaneseq
          %v689 = vshrl.u32 %v688, 7
          %v690 = vsub.s32 0, %v689
          %v691 = vrot.slane %v683, %v690
          %v692 = vadd.f32 %v686, %v691
          %s693 = sld [smem:[#allocation8 + $0xe]]
          %v694 = vtanh.pop %v692
          %v695 = vstv %s693
          %v696 = vmul.f32 %v695, %v694
          %v697 = vadd.f32 %v682, %v696
          %v698 = vld [vmem:[%s355 + $0xf] sm:$0x1]
          %699 = vset.pattern.permute.xlu0 15
          %700 = vperm.xlu0 %699, %v471
          %v701 = vpop.permute.xlu0 %700
          %v703 = vlaneseq
          %v704 = vshrl.u32 %v703, 7
          %v705 = vsub.s32 0, %v704
          %v706 = vrot.slane %v698, %v705
          %v707 = vadd.f32 %v701, %v706
          %s708 = sld [smem:[#allocation8 + $0xf]]
          %v709 = vtanh.pop %v707
          %v710 = vstv %s708
          %v711 = vmul.f32 %v710, %v709
          %v712 = vadd.f32 %v697, %v711
          %v713 = vld [vmem:[%s355 + $0x10] sm:$0x1]
          %714 = vset.pattern.permute.xlu0 16
          %715 = vperm.xlu0 %714, %v471
          %v716 = vpop.permute.xlu0 %715
          %v718 = vlaneseq
          %v719 = vshrl.u32 %v718, 7
          %v720 = vsub.s32 0, %v719
          %v721 = vrot.slane %v713, %v720
          %v722 = vadd.f32 %v716, %v721
          %s723 = sld [smem:[#allocation8 + $0x10]]
          %v724 = vtanh.pop %v722
          %v725 = vstv %s723
          %v726 = vmul.f32 %v725, %v724
          %v727 = vadd.f32 %v712, %v726
          %v728 = vld [vmem:[%s355 + $0x11] sm:$0x1]
          %729 = vset.pattern.permute.xlu0 17
          %730 = vperm.xlu0 %729, %v471
          %v731 = vpop.permute.xlu0 %730
          %v733 = vlaneseq
          %v734 = vshrl.u32 %v733, 7
          %v735 = vsub.s32 0, %v734
          %v736 = vrot.slane %v728, %v735
          %v737 = vadd.f32 %v731, %v736
          %s738 = sld [smem:[#allocation8 + $0x11]]
          %v739 = vtanh.pop %v737
          %v740 = vstv %s738
          %v741 = vmul.f32 %v740, %v739
          %v742 = vadd.f32 %v727, %v741
          %v743 = vld [vmem:[%s355 + $0x12] sm:$0x1]
          %744 = vset.pattern.permute.xlu0 18
          %745 = vperm.xlu0 %744, %v471
          %v746 = vpop.permute.xlu0 %745
          %v748 = vlaneseq
          %v749 = vshrl.u32 %v748, 7
          %v750 = vsub.s32 0, %v749
          %v751 = vrot.slane %v743, %v750
          %v752 = vadd.f32 %v746, %v751
          %s753 = sld [smem:[#allocation8 + $0x12]]
          %v754 = vtanh.pop %v752
          %v755 = vstv %s753
          %v756 = vmul.f32 %v755, %v754
          %v757 = vadd.f32 %v742, %v756
          %v758 = vld [vmem:[%s355 + $0x13] sm:$0x1]
          %759 = vset.pattern.permute.xlu0 19
          %760 = vperm.xlu0 %759, %v471
          %v761 = vpop.permute.xlu0 %760
          %v763 = vlaneseq
          %v764 = vshrl.u32 %v763, 7
          %v765 = vsub.s32 0, %v764
          %v766 = vrot.slane %v758, %v765
          %v767 = vadd.f32 %v761, %v766
          %s768 = sld [smem:[#allocation8 + $0x13]]
          %v769 = vtanh.pop %v767
          %v770 = vstv %s768
          %v771 = vmul.f32 %v770, %v769
          %v772 = vadd.f32 %v757, %v771
          %v773 = vld [vmem:[%s355 + $0x14] sm:$0x1]
          %774 = vset.pattern.permute.xlu0 20
          %775 = vperm.xlu0 %774, %v471
          %v776 = vpop.permute.xlu0 %775
          %v778 = vlaneseq
          %v779 = vshrl.u32 %v778, 7
          %v780 = vsub.s32 0, %v779
          %v781 = vrot.slane %v773, %v780
          %v782 = vadd.f32 %v776, %v781
          %s783 = sld [smem:[#allocation8 + $0x14]]
          %v784 = vtanh.pop %v782
          %v785 = vstv %s783
          %v786 = vmul.f32 %v785, %v784
          %v787 = vadd.f32 %v772, %v786
          %v788 = vld [vmem:[%s355 + $0x15] sm:$0x1]
          %789 = vset.pattern.permute.xlu0 21
          %790 = vperm.xlu0 %789, %v471
          %v791 = vpop.permute.xlu0 %790
          %v793 = vlaneseq
          %v794 = vshrl.u32 %v793, 7
          %v795 = vsub.s32 0, %v794
          %v796 = vrot.slane %v788, %v795
          %v797 = vadd.f32 %v791, %v796
          %s798 = sld [smem:[#allocation8 + $0x15]]
          %v799 = vtanh.pop %v797
          %v800 = vstv %s798
          %v801 = vmul.f32 %v800, %v799
          %v802 = vadd.f32 %v787, %v801
          %v803 = vld [vmem:[%s355 + $0x16] sm:$0x1]
          %804 = vset.pattern.permute.xlu0 22
          %805 = vperm.xlu0 %804, %v471
          %v806 = vpop.permute.xlu0 %805
          %v808 = vlaneseq
          %v809 = vshrl.u32 %v808, 7
          %v810 = vsub.s32 0, %v809
          %v811 = vrot.slane %v803, %v810
          %v812 = vadd.f32 %v806, %v811
          %s813 = sld [smem:[#allocation8 + $0x16]]
          %v814 = vtanh.pop %v812
          %v815 = vstv %s813
          %v816 = vmul.f32 %v815, %v814
          %v817 = vadd.f32 %v802, %v816
          %v818 = vld [vmem:[%s355 + $0x17] sm:$0x1]
          %819 = vset.pattern.permute.xlu0 23
          %820 = vperm.xlu0 %819, %v471
          %v821 = vpop.permute.xlu0 %820
          %v823 = vlaneseq
          %v824 = vshrl.u32 %v823, 7
          %v825 = vsub.s32 0, %v824
          %v826 = vrot.slane %v818, %v825
          %v827 = vadd.f32 %v821, %v826
          %s828 = sld [smem:[#allocation8 + $0x17]]
          %v829 = vtanh.pop %v827
          %v830 = vstv %s828
          %v831 = vmul.f32 %v830, %v829
          %v832 = vadd.f32 %v817, %v831
          %v833 = vld [vmem:[%s355 + $0x18] sm:$0x1]
          %834 = vset.pattern.permute.xlu0 24
          %835 = vperm.xlu0 %834, %v471
          %v836 = vpop.permute.xlu0 %835
          %v838 = vlaneseq
          %v839 = vshrl.u32 %v838, 7
          %v840 = vsub.s32 0, %v839
          %v841 = vrot.slane %v833, %v840
          %v842 = vadd.f32 %v836, %v841
          %s843 = sld [smem:[#allocation8 + $0x18]]
          %v844 = vtanh.pop %v842
          %v845 = vstv %s843
          %v846 = vmul.f32 %v845, %v844
          %v847 = vadd.f32 %v832, %v846
          %v848 = vld [vmem:[%s355 + $0x19] sm:$0x1]
          %849 = vset.pattern.permute.xlu0 25
          %850 = vperm.xlu0 %849, %v471
          %v851 = vpop.permute.xlu0 %850
          %v853 = vlaneseq
          %v854 = vshrl.u32 %v853, 7
          %v855 = vsub.s32 0, %v854
          %v856 = vrot.slane %v848, %v855
          %v857 = vadd.f32 %v851, %v856
          %s858 = sld [smem:[#allocation8 + $0x19]]
          %v859 = vtanh.pop %v857
          %v860 = vstv %s858
          %v861 = vmul.f32 %v860, %v859
          %v862 = vadd.f32 %v847, %v861
          %v863 = vld [vmem:[%s355 + $0x1a] sm:$0x1]
          %864 = vset.pattern.permute.xlu0 26
          %865 = vperm.xlu0 %864, %v471
          %v866 = vpop.permute.xlu0 %865
          %v868 = vlaneseq
          %v869 = vshrl.u32 %v868, 7
          %v870 = vsub.s32 0, %v869
          %v871 = vrot.slane %v863, %v870
          %v872 = vadd.f32 %v866, %v871
          %s873 = sld [smem:[#allocation8 + $0x1a]]
          %v874 = vtanh.pop %v872
          %v875 = vstv %s873
          %v876 = vmul.f32 %v875, %v874
          %v877 = vadd.f32 %v862, %v876
          %v878 = vld [vmem:[%s355 + $0x1b] sm:$0x1]
          %879 = vset.pattern.permute.xlu0 27
          %880 = vperm.xlu0 %879, %v471
          %v881 = vpop.permute.xlu0 %880
          %v883 = vlaneseq
          %v884 = vshrl.u32 %v883, 7
          %v885 = vsub.s32 0, %v884
          %v886 = vrot.slane %v878, %v885
          %v887 = vadd.f32 %v881, %v886
          %s888 = sld [smem:[#allocation8 + $0x1b]]
          %v889 = vtanh.pop %v887
          %v890 = vstv %s888
          %v891 = vmul.f32 %v890, %v889
          %v892 = vadd.f32 %v877, %v891
          %v893 = vld [vmem:[%s355 + $0x1c] sm:$0x1]
          %894 = vset.pattern.permute.xlu0 28
          %895 = vperm.xlu0 %894, %v471
          %v896 = vpop.permute.xlu0 %895
          %v898 = vlaneseq
          %v899 = vshrl.u32 %v898, 7
          %v900 = vsub.s32 0, %v899
          %v901 = vrot.slane %v893, %v900
          %v902 = vadd.f32 %v896, %v901
          %s903 = sld [smem:[#allocation8 + $0x1c]]
          %v904 = vtanh.pop %v902
          %v905 = vstv %s903
          %v906 = vmul.f32 %v905, %v904
          %v907 = vadd.f32 %v892, %v906
          %v908 = vld [vmem:[%s355 + $0x1d] sm:$0x1]
          %909 = vset.pattern.permute.xlu0 29
          %910 = vperm.xlu0 %909, %v471
          %v911 = vpop.permute.xlu0 %910
          %v913 = vlaneseq
          %v914 = vshrl.u32 %v913, 7
          %v915 = vsub.s32 0, %v914
          %v916 = vrot.slane %v908, %v915
          %v917 = vadd.f32 %v911, %v916
          %s918 = sld [smem:[#allocation8 + $0x1d]]
          %v919 = vtanh.pop %v917
          %v920 = vstv %s918
          %v921 = vmul.f32 %v920, %v919
          %v922 = vadd.f32 %v907, %v921
          %v923 = vld [vmem:[%s355 + $0x1e] sm:$0x1]
          %924 = vset.pattern.permute.xlu0 30
          %925 = vperm.xlu0 %924, %v471
          %v926 = vpop.permute.xlu0 %925
          %v928 = vlaneseq
          %v929 = vshrl.u32 %v928, 7
          %v930 = vsub.s32 0, %v929
          %v931 = vrot.slane %v923, %v930
          %v932 = vadd.f32 %v926, %v931
          %s933 = sld [smem:[#allocation8 + $0x1e]]
          %v934 = vtanh.pop %v932
          %v935 = vstv %s933
          %v936 = vmul.f32 %v935, %v934
          %v937 = vadd.f32 %v922, %v936
          %v938 = vld [vmem:[%s355 + $0x1f] sm:$0x1]
          %939 = vset.pattern.permute.xlu0 31
          %940 = vperm.xlu0 %939, %v471
          %v941 = vpop.permute.xlu0 %940
          %v943 = vlaneseq
          %v944 = vshrl.u32 %v943, 7
          %v945 = vsub.s32 0, %v944
          %v946 = vrot.slane %v938, %v945
          %v947 = vadd.f32 %v941, %v946
          %s948 = sld [smem:[#allocation8 + $0x1f]]
          %v949 = vtanh.pop %v947
          %v950 = vstv %s948
          %v951 = vmul.f32 %v950, %v949
          %v952 = vadd.f32 %v937, %v951
          %v953 = vstv %s464
          %vm954 = vcmp.lt.s32.totalorder %v463, %v953
          %v955 = vsel %vm954, %v952, -1000000.0
          %v956 = vld [vmem:[#allocation3] sm:$0xff]
          %vm957 = vcmask 80896
          %v958 = vsel %vm957, %v955, -inf
          %959 = vmax.xlane.f32.xlu0 %v958
          %v960 = vpop.xlane.xlu0 %959
          %v961 = vmax.f32 %v956, %v960
          %v962 = vsub.f32 %v956, %v961
          %v963 = vmul.f32 %v962, 1.442695
          %v964 = vpow.pop %v963
          %966 = vset.pattern.permute.xlu0 0
          %967 = vperm.xlu0 %966, %v961
          %v968 = vpop.permute.xlu0 %967
          %v970 = vsub.f32 %v955, %v968
          %v971 = vmul.f32 %v970, 1.442695
          %v972 = vpow.pop %v971
          %v973 = vld [vmem:[#allocation4] sm:$0xff]
          %v974 = vmul.f32 %v964, %v973
          %v975 = vsel %vm957, %v972, 0.0
          %976 = vadd.xlane.f32.xlu0 %v975
          %v977 = vpop.xlane.xlu0 %976
          %v978 = vadd.f32 %v974, %v977
          %vm979 = vcmask 7168
          %980 = vst.msk [vmem:[#allocation4] sm:$0xff] %vm979, %v978
          %v981 = vld [vmem:[#allocation5] sm:$0xff]
          %983 = vset.pattern.permute.xlu0 0
          %984 = vperm.xlu0 %983, %v964
          %v985 = vpop.permute.xlu0 %984
          %v987 = vmul.f32 %v985, %v981
          %v988 = vld [vmem:[%s364] sm:$0xff]
          %v989 = vld [vmem:[%s364 + $0x8] sm:$0x3]
          %v991 = vsel %vm957, %v972, 0
          %vm993 = vcmask 1041408
          %v995 = vsel %vm993, %v989, 0
          %997 = vmatprep.subr.mxu0 0.0
          %998 = vmatpush1.msra.mxu0 %v988
          %999 = vmatprep.subr.mxu0 0.0
          %1000 = vmatpush1.msra.mxu0 %v995
          %1001 = vmatprep.subr.mxu0 0.0
          %1002 = vmatpush1.msra.mxu0 0.0
          %1003 = vmatprep.subr.mxu0 0.0
          %1004 = vmatpush1.msra.mxu0 0.0
          %1005 = vmatprep.subr.mxu0 0.0
          %1006 = vmatpush1.msra.mxu0 0.0
          %1007 = vmatprep.subr.mxu0 0.0
          %1008 = vmatpush1.msra.mxu0 0.0
          %1009 = vmatprep.subr.mxu0 0.0
          %1010 = vmatpush1.msra.mxu0 0.0
          %1011 = vmatprep.subr.mxu0 0.0
          %1012 = vmatpush1.msra.mxu0 0.0
          %1013 = vmatprep.subr.mxu0 0.0
          %1014 = vmatpush1.msra.mxu0 0.0
          %1015 = vmatprep.subr.mxu0 0.0
          %1016 = vmatpush1.msra.mxu0 0.0
          %1017 = vmatprep.subr.mxu0 0.0
          %1018 = vmatpush1.msra.mxu0 0.0
          %1019 = vmatprep.subr.mxu0 0.0
          %1020 = vmatpush1.msra.mxu0 0.0
          %1021 = vmatprep.subr.mxu0 0.0
          %1022 = vmatpush1.msra.mxu0 0.0
          %1023 = vmatprep.subr.mxu0 0.0
          %1024 = vmatpush1.msra.mxu0 0.0
          %1025 = vmatprep.subr.mxu0 0.0
          %1026 = vmatpush1.msra.mxu0 0.0
          %1027 = vmatprep.subr.mxu0 0.0
          %1028 = vmatpush1.msra.mxu0 0.0
          %1029 = vmatprep.subr.mxu0 0.0
          %1030 = vmatpush1.msra.mxu0 0.0
          %1031 = vmatprep.subr.mxu0 0.0
          %1032 = vmatpush1.msra.mxu0 0.0
          %1033 = vmatprep.subr.mxu0 0.0
          %1034 = vmatpush1.msra.mxu0 0.0
          %1035 = vmatprep.subr.mxu0 0.0
          %1036 = vmatpush1.msra.mxu0 0.0
          %1037 = vmatprep.subr.mxu0 0.0
          %1038 = vmatpush1.msra.mxu0 0.0
          %1039 = vmatprep.subr.mxu0 0.0
          %1040 = vmatpush1.msra.mxu0 0.0
          %1041 = vmatprep.subr.mxu0 0.0
          %1042 = vmatpush1.msra.mxu0 0.0
          %1043 = vmatprep.subr.mxu0 0.0
          %1044 = vmatpush1.msra.mxu0 0.0
          %1045 = vmatprep.subr.mxu0 0.0
          %1046 = vmatpush1.msra.mxu0 0.0
          %1047 = vmatprep.subr.mxu0 0.0
          %1048 = vmatpush1.msra.mxu0 0.0
          %1049 = vmatprep.subr.mxu0 0.0
          %1050 = vmatpush1.msra.mxu0 0.0
          %1051 = vmatprep.subr.mxu0 0.0
          %1052 = vmatpush1.msra.mxu0 0.0
          %1053 = vmatprep.subr.mxu0 0.0
          %1054 = vmatpush1.msra.mxu0 0.0
          %1055 = vmatprep.subr.mxu0 0.0
          %1056 = vmatpush1.msra.mxu0 0.0
          %1057 = vmatprep.subr.mxu0 0.0
          %1058 = vmatpush1.msra.mxu0 0.0
          %1059 = vmatprep.subr.mxu0 0.0
          %1060 = vmatpush1.msra.mxu0 0.0
          %1061 = vmatprep.mubr.f32.mxu0 0.0
          %1062 = vmatmul.mubr.f32.gmra.mrb[0].mxu0 %v991
          %v1063 = vpop.f32.mrb[0].mxu0
          %v1064 = vadd.f32 0.0, %v1063
          %v1065 = vpop.f32.mrb[0].mxu0
          %1066 = vdwg.mxu0
          %v1067 = vadd.f32 %v987, %v1064
          %1068 = vst [vmem:[#allocation5] sm:$0xff] %v1067
          %1069 = vst.msk [vmem:[#allocation3] sm:$0xff] %vm979, %v961
        $region60: #{additive_attention.1} parent=43 // pred_fallthru
          _
        // Predicated region
        $region61: #{additive_attention.1} parent=43 // pred_check
          %p1070 = pneg %p372
        $region62: #{additive_attention.1} parent=43 // pred_check_branch
          %1072 = sbr.rel (%p1070) target = $region64
        $region63: #{additive_attention.1} parent=43 // pred_region
          %v1073 = vld [vmem:[#allocation4] sm:$0xff]
          %v1074 = vrcp.pop %v1073
          %v1075 = vld [vmem:[#allocation5] sm:$0xff]
          %1077 = vset.pattern.permute.xlu0 0
          %1078 = vperm.xlu0 %1077, %v1074
          %v1079 = vpop.permute.xlu0 %1078
          %v1081 = vmul.f32 %v1075, %v1079
          %1082 = vst [vmem:[%s370] sm:$0xff] %v1081
        $region64: #{additive_attention.1} parent=43 // pred_fallthru
          _
        %s1083 = sadd.s32 %s24, %s25
        %p1084 = scmp.lt.s32.totalorder %s1083, 1
        %s1085 = scalar_select %p1084, %s1083, 1
        %s1086 = smul.addr %s1085, 8
        %s1087 = scalar_lea.vmem %s6, %s1086
        // Predicated region
        $region65: #{additive_attention.1} parent=43 // pred_check
          %p1088 = pneg %p205
        $region66: #{additive_attention.1} parent=43 // pred_check_branch
          %1090 = sbr.rel (%p1088) target = $region68
        $region67: #{additive_attention.1} parent=43 // pred_region
          %s1091 = sadd.s32 %s24, %s25
        $region68: #{additive_attention.1} parent=43 // pred_fallthru
          _
      $region44: #{additive_attention.1} parent=5 // pred_fallthru
        _
      %p1092 = scmp.le.s32.totalorder 2, %s14
      // Predicated region
      $region69: #{additive_attention.1} parent=5 // pred_check
        %p1093 = pneg %p1092
      $region70: #{additive_attention.1} parent=5 // pred_check_branch
        %1095 = sbr.rel (%p1093) target = $region72
      $region71: #{additive_attention.1} parent=5 // pred_region
        %s1096 = ssub.s32 %s14, 2
        // Predicated region
        $region73: #{additive_attention.1} parent=71 // pred_check
          %p1097 = pneg %p211
        $region74: #{additive_attention.1} parent=71 // pred_check_branch
          %1099 = sbr.rel (%p1097) target = $region76
        $region75: #{additive_attention.1} parent=71 // pred_region
          %s1100 = sadd.s32 %s27, %s28
          %p1101 = scmp.lt.s32.totalorder %s1100, 1
          %s1102 = scalar_select %p1101, %s1100, 1
          %s1103 = smul.addr %s1102, 8
          %s1104 = scalar_lea.vmem %s6, %s1103
        $region76: #{additive_attention.1} parent=71 // pred_fallthru
          _
      $region72: #{additive_attention.1} parent=5 // pred_fallthru
        _
    $region6: #{additive_attention.1} parent=1 // loop_footer
      %s18 = sadd.s32 1, %s14
    $region7: #{additive_attention.1} parent=1 // loop_footer_branch
      %13 = sbr.rel target = $region3
    $region8: #{additive_attention.1} parent=1 // loop_exit
      _
    %1105 = vsyncpa [#allocation7], 1
    %s1106 = scalar_lea.sflag [#allocation7], 1
    %1107 = vsyncpa %s1106, 1
    %1108 = vsyncpa [#allocation9], 1

</llo_original>
